<compile_context>
chip_gen: v7x
topology: tpu7x:2x2x1
jax: 0.10.0
libtpu: 0.0.40
codegen_flags: <defaults>
</compile_context>

<pallas_src>
import numpy as np

import jax
import jax.numpy as jnp
from jax.experimental import pallas as pl
from jax.experimental.pallas import tpu as pltpu


# ----------------------------- Pallas kernels ------------------------------

def _freq_kernel(lam_ref, x_ref, loc_ref, mhf_ref, gr_ref, gi_ref,
                 w1b_ref, m3_ref, mhi_ref, rr_ref, out_ref, stats_ref):
    """Fused frequency-domain pipeline for one batch element.

    x_ref   : (1, H, C*W)        spatial input, lanes = (c, w)
    loc_ref : (H, Wf)            fftshift-ed locMap
    mhf_ref : (2H, H)            forward H-DFT (fftshift + ortho scale folded)
    gr/gi   : (C*W, 2C*Wf)       forward W-rDFT, block structure over channels
    w1b_ref : ((2C+1)*Wf, 2C*Wf) 1x1 conv as block matrix
    m3_ref  : (3, (2C+1)*Wf, 2C*Wf) dilated 3x3 conv, one block matrix per kh
                                     (kw reflect taps folded in)
    mhi_ref : (2H, H)            inverse H-DFT (ifftshift folded in)
    rr_ref  : (2, 2C*Wf, C*W)    inverse W-rDFT (hermitian weights + scale)
    """
    hd = x_ref.shape[1]                              # H (=32)

    xt = x_ref[0]                                    # (H, C*W)
    lam = lam_ref[0]
    loc = loc_ref[...]                               # (H, Wf)

    # ---- rfft2 (ortho); fftshift along H is folded into mhf rows ----
    ys = jnp.dot(mhf_ref[...], xt, preferred_element_type=jnp.float32)      # (2H, C*W)
    fsh = (jnp.dot(ys[0:hd], gr_ref[...], preferred_element_type=jnp.float32) +
           jnp.dot(ys[hd:2 * hd], gi_ref[...],
                   preferred_element_type=jnp.float32))                     # (H, 2C*Wf)

    # ---- 1x1 conv (conv_layer_down55, bias=False) + ReLU ----
    cat1 = jnp.concatenate([fsh, loc], axis=1)                              # (H, (2C+1)*Wf)
    y1 = jnp.maximum(
        jnp.dot(cat1, w1b_ref[...], preferred_element_type=jnp.float32), 0.0)

    # ---- dilated 3x3 reflect-padded conv (conv_layer_down55_shift) ----
    cat2 = jnp.concatenate([y1, loc], axis=1)                               # (H, (2C+1)*Wf)
    # kh taps = sublane-shifted views with reflect boundary (the kw taps are
    # folded into the m3 block matrices, so no 9x im2col blow-up).
    d0 = jnp.concatenate([cat2[2:3], cat2[1:2], cat2[0:hd - 2]], axis=0)
    d2 = jnp.concatenate([cat2[2:hd], cat2[hd - 2:hd - 1],
                          cat2[hd - 3:hd - 2]], axis=0)
    y2 = (jnp.dot(d0, m3_ref[0], preferred_element_type=jnp.float32) +
          jnp.dot(cat2, m3_ref[1], preferred_element_type=jnp.float32) +
          jnp.dot(d2, m3_ref[2], preferred_element_type=jnp.float32))       # (H, 2C*Wf)

    # ---- lambda blend (in shifted space; the un-shift is folded into mhi) ----
    zsh = fsh * lam + y2 * (1.0 - lam)

    # ---- irfft2 (ortho); ifftshift along H is folded into mhi columns ----
    pp = jnp.dot(mhi_ref[...], zsh, preferred_element_type=jnp.float32)     # (2H, 2C*Wf)
    xo = (jnp.dot(pp[0:hd], rr_ref[0], preferred_element_type=jnp.float32) +
          jnp.dot(pp[hd:2 * hd], rr_ref[1],
                  preferred_element_type=jnp.float32))                      # (H, C*W)

    out_ref[0] = xo
    # per-batch partial statistics for the global mean / clip correction
    stats_ref[0] = jnp.concatenate(
        [jnp.sum(xo, axis=0, keepdims=True),
         jnp.sum(xt, axis=0, keepdims=True),
         jnp.min(xt, axis=0, keepdims=True),
         jnp.max(xt, axis=0, keepdims=True)], axis=0)                       # (4, C*W)


def _finalize_kernel(s_ref, y_ref, o_ref):
    # output - mean(output) + mean(x), clipped to [min(x)-0.5, max(x)+0.5].
    # s_ref (SMEM): [mean(x)-mean(out), min(x)-0.5, max(x)+0.5]
    o_ref[...] = jnp.clip(y_ref[...] + s_ref[0], s_ref[1], s_ref[2])


# ------------------------------- forward pass -------------------------------

def _reflect_index(j, n):
    if j < 0:
        return -j
    if j >= n:
        return 2 * (n - 1) - j
    return j


def fourier_unit_modified(x, locMap, lambda_base, w1, w3):
    """x: (B, C, 32, 32) f32 (NCHW).  Returns (B, C, 32, 32) f32."""
    B, C, H, W = x.shape
    Wf = W // 2 + 1
    C2 = 2 * C
    CW = C * W
    half = H // 2

    # ---------- static DFT / layout constants (trace-time numpy) ----------
    hh = np.arange(H)
    ang_h = 2.0 * np.pi * np.outer(hh, hh) / H
    ch_m = np.cos(ang_h)
    sh_m = np.sin(ang_h)
    # forward H-DFT: exp(-i), fftshift of output rows + full 1/sqrt(H*W) scale
    mhf = (np.concatenate([np.roll(ch_m, -half, axis=0),
                           -np.roll(sh_m, -half, axis=0)], axis=0)
           / np.sqrt(H * W)).astype(np.float32)                              # (2H, H)

    ww = np.arange(W)
    kk = np.arange(Wf)
    ang_w = 2.0 * np.pi * np.outer(ww, kk) / W
    cw_m = np.cos(ang_w)
    sw_m = np.sin(ang_w)                                                     # (W, Wf)
    gr = np.zeros((CW, C2 * Wf), np.float32)
    gi = np.zeros((CW, C2 * Wf), np.float32)
    for c in range(C):
        gr[c * W:(c + 1) * W, (2 * c) * Wf:(2 * c + 1) * Wf] = cw_m
        gr[c * W:(c + 1) * W, (2 * c + 1) * Wf:(2 * c + 2) * Wf] = -sw_m
        gi[c * W:(c + 1) * W, (2 * c) * Wf:(2 * c + 1) * Wf] = sw_m
        gi[c * W:(c + 1) * W, (2 * c + 1) * Wf:(2 * c + 2) * Wf] = cw_m

    # inverse H-DFT: exp(+i), ifftshift folded into the columns
    mhi = np.concatenate([np.roll(ch_m, -half, axis=1),
                          np.roll(sh_m, -half, axis=1)], axis=0).astype(np.float32)

    # inverse W-rDFT with hermitian weights (even W) and 1/sqrt(H*W) scale
    wk = np.full((Wf,), 2.0)
    wk[0] = 1.0
    wk[Wf - 1] = 1.0
    ia = (wk[:, None] * np.cos(2.0 * np.pi * np.outer(kk, ww) / W)) / np.sqrt(H * W)
    ib = (-wk[:, None] * np.sin(2.0 * np.pi * np.outer(kk, ww) / W)) / np.sqrt(H * W)
    r1 = np.zeros((C2 * Wf, CW), np.float32)
    r2 = np.zeros((C2 * Wf, CW), np.float32)
    for c in range(C):
        r1[(2 * c) * Wf:(2 * c + 1) * Wf, c * W:(c + 1) * W] = ia
        r1[(2 * c + 1) * Wf:(2 * c + 2) * Wf, c * W:(c + 1) * W] = ib
        r2[(2 * c) * Wf:(2 * c + 1) * Wf, c * W:(c + 1) * W] = ib
        r2[(2 * c + 1) * Wf:(2 * c + 2) * Wf, c * W:(c + 1) * W] = -ia
    rr = np.stack([r1, r2], axis=0).astype(np.float32)                       # (2, 2C*Wf, C*W)

    # 0/1 selection matrices implementing the reflect-padded kw taps
    s_sel = np.zeros((3, Wf, Wf), np.float32)
    for kw in range(3):
        for kd in range(Wf):
            s_sel[kw, _reflect_index(kd + 2 * (kw - 1), Wf), kd] = 1.0

    # ---------- weight-dependent block matrices (tiny jnp ops) ----------
    eye_wf = jnp.eye(Wf, dtype=jnp.float32)
    w1b = jnp.kron(jnp.transpose(w1[:, :, 0, 0]), eye_wf)                    # (9Wf, 8Wf)
    m3 = jnp.stack(
        [sum(jnp.kron(jnp.transpose(w3[:, :, kh, kw]), jnp.asarray(s_sel[kw]))
             for kw in range(3))
         for kh in range(3)], axis=0)                                        # (3, 9Wf, 8Wf)

    lam = jax.nn.sigmoid(lambda_base).reshape(1).astype(jnp.float32)
    loc_sh = jnp.roll(locMap.astype(jnp.float32), half, axis=0)              # fftshift(locMap, -2)

    # (B, C, H, W) -> (B, H, C*W): lanes = (c, w), i.e. lane-dense blocks of 128
    xt = jnp.transpose(x.astype(jnp.float32), (0, 2, 1, 3)).reshape(B, H, CW)

    y, stats = pl.pallas_call(
        _freq_kernel,
        out_shape=(jax.ShapeDtypeStruct((B, H, CW), jnp.float32),
                   jax.ShapeDtypeStruct((B, 4, CW), jnp.float32)),
        grid=(B,),
        in_specs=[
            pl.BlockSpec(memory_space=pltpu.MemorySpace.SMEM),               # lam
            pl.BlockSpec((1, H, CW), lambda b: (b, 0, 0)),                   # xt
            pl.BlockSpec((H, Wf), lambda b: (0, 0)),                         # loc_sh
            pl.BlockSpec((2 * H, H), lambda b: (0, 0)),                      # mhf
            pl.BlockSpec((CW, C2 * Wf), lambda b: (0, 0)),                   # gr
            pl.BlockSpec((CW, C2 * Wf), lambda b: (0, 0)),                   # gi
            pl.BlockSpec(((C2 + 1) * Wf, C2 * Wf), lambda b: (0, 0)),        # w1b
            pl.BlockSpec((3, (C2 + 1) * Wf, C2 * Wf), lambda b: (0, 0, 0)),  # m3
            pl.BlockSpec((2 * H, H), lambda b: (0, 0)),                      # mhi
            pl.BlockSpec((2, C2 * Wf, CW), lambda b: (0, 0, 0)),             # rr
        ],
        out_specs=(pl.BlockSpec((1, H, CW), lambda b: (b, 0, 0)),
                   pl.BlockSpec((1, 4, CW), lambda b: (b, 0, 0))),
        compiler_params=pltpu.CompilerParams(
            dimension_semantics=("parallel",),
            vmem_limit_bytes=32 * 1024 * 1024),
    )(lam, xt, loc_sh, jnp.asarray(mhf), jnp.asarray(gr), jnp.asarray(gi),
      w1b, m3, jnp.asarray(mhi), jnp.asarray(rr))

    # Global (whole-tensor, matching torch) mean correction + clip scalars,
    # reduced from the tiny per-batch partials produced by the fused kernel.
    total = float(B * C * H * W)
    shift = (jnp.sum(stats[:, 1, :]) - jnp.sum(stats[:, 0, :])) / total
    lo = jnp.min(stats[:, 2, :]) - 0.5
    hi = jnp.max(stats[:, 3, :]) + 0.5
    svec = jnp.stack([shift, lo, hi]).astype(jnp.float32)

    out_t = pl.pallas_call(
        _finalize_kernel,
        out_shape=jax.ShapeDtypeStruct((B, H, CW), jnp.float32),
        grid=(1,),
        in_specs=[pl.BlockSpec(memory_space=pltpu.MemorySpace.SMEM),
                  pl.BlockSpec((B, H, CW), lambda i: (0, 0, 0))],
        out_specs=pl.BlockSpec((B, H, CW), lambda i: (0, 0, 0)),
        compiler_params=pltpu.CompilerParams(
            dimension_semantics=("arbitrary",)),
    )(svec, y)

    return out_t.reshape(B, H, C, W).transpose(0, 2, 1, 3)


# ---------------------------------- main -------------------------------------

if __name__ == "__main__":
    # locMap in __init__ is (32, 17), so spatial must be 32x32; out_channels
    # must equal in_channels for the second conv's channel count to match.
    B, C, H, W = 2, 4, 32, 32
    C2 = 2 * C

    key = jax.random.PRNGKey(0)
    k_loc, k_w1, k_w3, k_x = jax.random.split(key, 4)

    # Deterministic synthetic parameters (shapes from the module's __init__).
    locMap = jax.random.uniform(k_loc, (32, 32 // 2 + 1), dtype=jnp.float32)
    lambda_base = jnp.float32(0.0)
    b1 = 1.0 / ((C2 + 1) ** 0.5)
    w1 = jax.random.uniform(k_w1, (C2, C2 + 1, 1, 1), jnp.float32, -b1, b1)
    b3 = 1.0 / (((C2 + 1) * 9) ** 0.5)
    w3 = jax.random.uniform(k_w3, (C2, C2 + 1, 3, 3), jnp.float32, -b3, b3)

    x = jax.random.normal(k_x, (B, C, H, W), dtype=jnp.float32)

    fwd = jax.jit(fourier_unit_modified)
    out = jax.block_until_ready(fwd(x, locMap, lambda_base, w1, w3))

    assert out.shape == (B, C, H, W)
    assert bool(jnp.all(jnp.isfinite(out)))
    print("KERNEL_OK")
</pallas_src>

<mosaic_0001>
module attributes {stable_mosaic.version = 11 : i64} {
  func.func @_freq_kernel(%arg0: i32, %arg1: memref<1xf32, #tpu.memory_space<smem>>, %arg2: memref<1x32x128xf32, #tpu.memory_space<vmem>>, %arg3: memref<32x17xf32, #tpu.memory_space<vmem>>, %arg4: memref<64x32xf32, #tpu.memory_space<vmem>>, %arg5: memref<128x136xf32, #tpu.memory_space<vmem>>, %arg6: memref<128x136xf32, #tpu.memory_space<vmem>>, %arg7: memref<153x136xf32, #tpu.memory_space<vmem>>, %arg8: memref<3x153x136xf32, #tpu.memory_space<vmem>>, %arg9: memref<64x32xf32, #tpu.memory_space<vmem>>, %arg10: memref<2x136x128xf32, #tpu.memory_space<vmem>>, %arg11: memref<1x32x128xf32, #tpu.memory_space<vmem>>, %arg12: memref<1x4x128xf32, #tpu.memory_space<vmem>>) attributes {dimension_semantics = [#tpu.dimension_semantics<parallel>], iteration_bounds = array<i64: 2>, scalar_prefetch = 0 : i64, scratch_operands = 0 : i64, tpu.core_type = #tpu.core_type<tc>, window_params = [{transform_indices = @transform_0, window_bounds = array<i64: 1>}, {transform_indices = @transform_1, window_bounds = array<i64: 1, 32, 128>}, {pipeline_mode = #tpu.pipeline_mode<synchronous>, transform_indices = @transform_2, window_bounds = array<i64: 32, 17>}, {pipeline_mode = #tpu.pipeline_mode<synchronous>, transform_indices = @transform_3, window_bounds = array<i64: 64, 32>}, {pipeline_mode = #tpu.pipeline_mode<synchronous>, transform_indices = @transform_4, window_bounds = array<i64: 128, 136>}, {pipeline_mode = #tpu.pipeline_mode<synchronous>, transform_indices = @transform_5, window_bounds = array<i64: 128, 136>}, {pipeline_mode = #tpu.pipeline_mode<synchronous>, transform_indices = @transform_6, window_bounds = array<i64: 153, 136>}, {pipeline_mode = #tpu.pipeline_mode<synchronous>, transform_indices = @transform_7, window_bounds = array<i64: 3, 153, 136>}, {pipeline_mode = #tpu.pipeline_mode<synchronous>, transform_indices = @transform_8, window_bounds = array<i64: 64, 32>}, {pipeline_mode = #tpu.pipeline_mode<synchronous>, transform_indices = @transform_9, window_bounds = array<i64: 2, 136, 128>}, {transform_indices = @transform_10, window_bounds = array<i64: 1, 32, 128>}, {transform_indices = @transform_11, window_bounds = array<i64: 1, 4, 128>}]} {
    %c0 = arith.constant 0 : index
    %c0_0 = arith.constant 0 : index
    %c0_1 = arith.constant 0 : index
    %0 = vector.load %arg2[%c0, %c0_0, %c0_1] : memref<1x32x128xf32, #tpu.memory_space<vmem>>, vector<1x32x128xf32>
    %1 = vector.shape_cast %0 : vector<1x32x128xf32> to vector<32x128xf32>
    %c0_2 = arith.constant 0 : index
    %2 = memref.load %arg1[%c0_2] : memref<1xf32, #tpu.memory_space<smem>>
    %c0_3 = arith.constant 0 : index
    %c0_4 = arith.constant 0 : index
    %3 = vector.load %arg3[%c0_3, %c0_4] : memref<32x17xf32, #tpu.memory_space<vmem>>, vector<32x17xf32>
    %c0_5 = arith.constant 0 : index
    %c0_6 = arith.constant 0 : index
    %4 = vector.load %arg4[%c0_5, %c0_6] : memref<64x32xf32, #tpu.memory_space<vmem>>, vector<64x32xf32>
    %cst = arith.constant dense<0.000000e+00> : vector<64x128xf32>
    %5 = tpu.matmul %4, %1, %cst {dimension_numbers = #tpu.dot_dimension_numbers<[1], [0], [0], [1], [0, 0, 1, 1], [], []>} : vector<64x32xf32>, vector<32x128xf32>, vector<64x128xf32> -> vector<64x128xf32>
    %6 = vector.extract_strided_slice %5 {offsets = [0, 0], sizes = [32, 128], strides = [1, 1]} : vector<64x128xf32> to vector<32x128xf32>
    %c0_7 = arith.constant 0 : index
    %c0_8 = arith.constant 0 : index
    %7 = vector.load %arg5[%c0_7, %c0_8] : memref<128x136xf32, #tpu.memory_space<vmem>>, vector<128x136xf32>
    %cst_9 = arith.constant dense<0.000000e+00> : vector<32x136xf32>
    %8 = tpu.matmul %6, %7, %cst_9 {dimension_numbers = #tpu.dot_dimension_numbers<[1], [0], [0], [1], [0, 0, 1, 1], [], []>} : vector<32x128xf32>, vector<128x136xf32>, vector<32x136xf32> -> vector<32x136xf32>
    %9 = vector.extract_strided_slice %5 {offsets = [32, 0], sizes = [32, 128], strides = [1, 1]} : vector<64x128xf32> to vector<32x128xf32>
    %c0_10 = arith.constant 0 : index
    %c0_11 = arith.constant 0 : index
    %10 = vector.load %arg6[%c0_10, %c0_11] : memref<128x136xf32, #tpu.memory_space<vmem>>, vector<128x136xf32>
    %cst_12 = arith.constant dense<0.000000e+00> : vector<32x136xf32>
    %11 = tpu.matmul %9, %10, %cst_12 {dimension_numbers = #tpu.dot_dimension_numbers<[1], [0], [0], [1], [0, 0, 1, 1], [], []>} : vector<32x128xf32>, vector<128x136xf32>, vector<32x136xf32> -> vector<32x136xf32>
    %12 = arith.addf %8, %11 : vector<32x136xf32>
    %13 = tpu.concatenate %12, %3 in 1 : vector<32x136xf32>, vector<32x17xf32> -> vector<32x153xf32>
    %c0_13 = arith.constant 0 : index
    %c0_14 = arith.constant 0 : index
    %14 = vector.load %arg7[%c0_13, %c0_14] : memref<153x136xf32, #tpu.memory_space<vmem>>, vector<153x136xf32>
    %cst_15 = arith.constant dense<0.000000e+00> : vector<32x136xf32>
    %15 = tpu.matmul %13, %14, %cst_15 {dimension_numbers = #tpu.dot_dimension_numbers<[1], [0], [0], [1], [0, 0, 1, 1], [], []>} : vector<32x153xf32>, vector<153x136xf32>, vector<32x136xf32> -> vector<32x136xf32>
    %cst_16 = arith.constant 0.000000e+00 : f32
    %16 = vector.broadcast %cst_16 : f32 to vector<32x136xf32>
    %17 = arith.maximumf %15, %16 : vector<32x136xf32>
    %18 = tpu.concatenate %17, %3 in 1 : vector<32x136xf32>, vector<32x17xf32> -> vector<32x153xf32>
    %19 = vector.extract_strided_slice %18 {offsets = [2, 0], sizes = [1, 153], strides = [1, 1]} : vector<32x153xf32> to vector<1x153xf32>
    %20 = vector.extract_strided_slice %18 {offsets = [1, 0], sizes = [1, 153], strides = [1, 1]} : vector<32x153xf32> to vector<1x153xf32>
    %21 = vector.extract_strided_slice %18 {offsets = [0, 0], sizes = [30, 153], strides = [1, 1]} : vector<32x153xf32> to vector<30x153xf32>
    %22 = tpu.concatenate %19, %20, %21 in 0 : vector<1x153xf32>, vector<1x153xf32>, vector<30x153xf32> -> vector<32x153xf32>
    %23 = vector.extract_strided_slice %18 {offsets = [2, 0], sizes = [30, 153], strides = [1, 1]} : vector<32x153xf32> to vector<30x153xf32>
    %24 = vector.extract_strided_slice %18 {offsets = [30, 0], sizes = [1, 153], strides = [1, 1]} : vector<32x153xf32> to vector<1x153xf32>
    %25 = vector.extract_strided_slice %18 {offsets = [29, 0], sizes = [1, 153], strides = [1, 1]} : vector<32x153xf32> to vector<1x153xf32>
    %26 = tpu.concatenate %23, %24, %25 in 0 : vector<30x153xf32>, vector<1x153xf32>, vector<1x153xf32> -> vector<32x153xf32>
    %c0_17 = arith.constant 0 : index
    %c0_18 = arith.constant 0 : index
    %c0_19 = arith.constant 0 : index
    %27 = vector.load %arg8[%c0_17, %c0_18, %c0_19] : memref<3x153x136xf32, #tpu.memory_space<vmem>>, vector<1x153x136xf32>
    %28 = vector.shape_cast %27 : vector<1x153x136xf32> to vector<153x136xf32>
    %cst_20 = arith.constant dense<0.000000e+00> : vector<32x136xf32>
    %29 = tpu.matmul %22, %28, %cst_20 {dimension_numbers = #tpu.dot_dimension_numbers<[1], [0], [0], [1], [0, 0, 1, 1], [], []>} : vector<32x153xf32>, vector<153x136xf32>, vector<32x136xf32> -> vector<32x136xf32>
    %c1 = arith.constant 1 : index
    %c0_21 = arith.constant 0 : index
    %c0_22 = arith.constant 0 : index
    %30 = vector.load %arg8[%c1, %c0_21, %c0_22] : memref<3x153x136xf32, #tpu.memory_space<vmem>>, vector<1x153x136xf32>
    %31 = vector.shape_cast %30 : vector<1x153x136xf32> to vector<153x136xf32>
    %cst_23 = arith.constant dense<0.000000e+00> : vector<32x136xf32>
    %32 = tpu.matmul %18, %31, %cst_23 {dimension_numbers = #tpu.dot_dimension_numbers<[1], [0], [0], [1], [0, 0, 1, 1], [], []>} : vector<32x153xf32>, vector<153x136xf32>, vector<32x136xf32> -> vector<32x136xf32>
    %33 = arith.addf %29, %32 : vector<32x136xf32>
    %c2 = arith.constant 2 : index
    %c0_24 = arith.constant 0 : index
    %c0_25 = arith.constant 0 : index
    %34 = vector.load %arg8[%c2, %c0_24, %c0_25] : memref<3x153x136xf32, #tpu.memory_space<vmem>>, vector<1x153x136xf32>
    %35 = vector.shape_cast %34 : vector<1x153x136xf32> to vector<153x136xf32>
    %cst_26 = arith.constant dense<0.000000e+00> : vector<32x136xf32>
    %36 = tpu.matmul %26, %35, %cst_26 {dimension_numbers = #tpu.dot_dimension_numbers<[1], [0], [0], [1], [0, 0, 1, 1], [], []>} : vector<32x153xf32>, vector<153x136xf32>, vector<32x136xf32> -> vector<32x136xf32>
    %37 = arith.addf %33, %36 : vector<32x136xf32>
    %38 = vector.broadcast %2 : f32 to vector<32x136xf32>
    %39 = arith.mulf %12, %38 : vector<32x136xf32>
    %cst_27 = arith.constant 1.000000e+00 : f32
    %40 = arith.subf %cst_27, %2 : f32
    %41 = vector.broadcast %40 : f32 to vector<32x136xf32>
    %42 = arith.mulf %37, %41 : vector<32x136xf32>
    %43 = arith.addf %39, %42 : vector<32x136xf32>
    %c0_28 = arith.constant 0 : index
    %c0_29 = arith.constant 0 : index
    %44 = vector.load %arg9[%c0_28, %c0_29] : memref<64x32xf32, #tpu.memory_space<vmem>>, vector<64x32xf32>
    %cst_30 = arith.constant dense<0.000000e+00> : vector<64x136xf32>
    %45 = tpu.matmul %44, %43, %cst_30 {dimension_numbers = #tpu.dot_dimension_numbers<[1], [0], [0], [1], [0, 0, 1, 1], [], []>} : vector<64x32xf32>, vector<32x136xf32>, vector<64x136xf32> -> vector<64x136xf32>
    %46 = vector.extract_strided_slice %45 {offsets = [0, 0], sizes = [32, 136], strides = [1, 1]} : vector<64x136xf32> to vector<32x136xf32>
    %c0_31 = arith.constant 0 : index
    %c0_32 = arith.constant 0 : index
    %c0_33 = arith.constant 0 : index
    %47 = vector.load %arg10[%c0_31, %c0_32, %c0_33] : memref<2x136x128xf32, #tpu.memory_space<vmem>>, vector<1x136x128xf32>
    %48 = vector.shape_cast %47 : vector<1x136x128xf32> to vector<136x128xf32>
    %cst_34 = arith.constant dense<0.000000e+00> : vector<32x128xf32>
    %49 = tpu.matmul %46, %48, %cst_34 {dimension_numbers = #tpu.dot_dimension_numbers<[1], [0], [0], [1], [0, 0, 1, 1], [], []>} : vector<32x136xf32>, vector<136x128xf32>, vector<32x128xf32> -> vector<32x128xf32>
    %50 = vector.extract_strided_slice %45 {offsets = [32, 0], sizes = [32, 136], strides = [1, 1]} : vector<64x136xf32> to vector<32x136xf32>
    %c1_35 = arith.constant 1 : index
    %c0_36 = arith.constant 0 : index
    %c0_37 = arith.constant 0 : index
    %51 = vector.load %arg10[%c1_35, %c0_36, %c0_37] : memref<2x136x128xf32, #tpu.memory_space<vmem>>, vector<1x136x128xf32>
    %52 = vector.shape_cast %51 : vector<1x136x128xf32> to vector<136x128xf32>
    %cst_38 = arith.constant dense<0.000000e+00> : vector<32x128xf32>
    %53 = tpu.matmul %50, %52, %cst_38 {dimension_numbers = #tpu.dot_dimension_numbers<[1], [0], [0], [1], [0, 0, 1, 1], [], []>} : vector<32x136xf32>, vector<136x128xf32>, vector<32x128xf32> -> vector<32x128xf32>
    %54 = arith.addf %49, %53 : vector<32x128xf32>
    %c0_39 = arith.constant 0 : index
    %c0_40 = arith.constant 0 : index
    %c0_41 = arith.constant 0 : index
    %55 = vector.load %arg11[%c0_39, %c0_40, %c0_41] : memref<1x32x128xf32, #tpu.memory_space<vmem>>, vector<1x32x128xf32>
    %56 = vector.shape_cast %55 : vector<1x32x128xf32> to vector<32x128xf32>
    %57 = vector.shape_cast %54 : vector<32x128xf32> to vector<1x32x128xf32>
    tpu.vector_store %arg11[%c0_39, %c0_40, %c0_41], %57 {strides = array<i32>} : memref<1x32x128xf32, #tpu.memory_space<vmem>>, vector<1x32x128xf32>,
    %cst_42 = arith.constant dense<0.000000e+00> : vector<128xf32>
    %58 = vector.multi_reduction <add>, %54, %cst_42 [0] : vector<32x128xf32> to vector<128xf32>
    %59 = vector.shape_cast %58 : vector<128xf32> to vector<1x128xf32>
    %cst_43 = arith.constant dense<0.000000e+00> : vector<128xf32>
    %60 = vector.multi_reduction <add>, %1, %cst_43 [0] : vector<32x128xf32> to vector<128xf32>
    %61 = vector.shape_cast %60 : vector<128xf32> to vector<1x128xf32>
    %cst_44 = arith.constant dense<0x7F800000> : vector<128xf32>
    %62 = vector.multi_reduction <minimumf>, %1, %cst_44 [0] : vector<32x128xf32> to vector<128xf32>
    %63 = vector.shape_cast %62 : vector<128xf32> to vector<1x128xf32>
    %cst_45 = arith.constant dense<0xFF800000> : vector<128xf32>
    %64 = vector.multi_reduction <maximumf>, %1, %cst_45 [0] : vector<32x128xf32> to vector<128xf32>
    %65 = vector.shape_cast %64 : vector<128xf32> to vector<1x128xf32>
    %66 = tpu.concatenate %59, %61, %63, %65 in 0 : vector<1x128xf32>, vector<1x128xf32>, vector<1x128xf32>, vector<1x128xf32> -> vector<4x128xf32>
    %c0_46 = arith.constant 0 : index
    %c0_47 = arith.constant 0 : index
    %c0_48 = arith.constant 0 : index
    %67 = vector.load %arg12[%c0_46, %c0_47, %c0_48] : memref<1x4x128xf32, #tpu.memory_space<vmem>>, vector<1x4x128xf32>
    %68 = vector.shape_cast %67 : vector<1x4x128xf32> to vector<4x128xf32>
    %69 = vector.shape_cast %66 : vector<4x128xf32> to vector<1x4x128xf32>
    tpu.vector_store %arg12[%c0_46, %c0_47, %c0_48], %69 {strides = array<i32>} : memref<1x4x128xf32, #tpu.memory_space<vmem>>, vector<1x4x128xf32>,
    return
  }
  func.func @transform_0(%arg0: i32) -> i32 {
    %c0_i32 = arith.constant 0 : i32
    %c0_i32_0 = arith.constant 0 : i32
    return %c0_i32 : i32
  }
  func.func @transform_1(%arg0: i32) -> (i32, i32, i32) {
    %c0_i32 = arith.constant 0 : i32
    %c0_i32_0 = arith.constant 0 : i32
    %c0_i32_1 = arith.constant 0 : i32
    return %arg0, %c0_i32, %c0_i32_0 : i32, i32, i32
  }
  func.func @transform_2(%arg0: i32) -> (i32, i32) {
    %c0_i32 = arith.constant 0 : i32
    %c0_i32_0 = arith.constant 0 : i32
    %c0_i32_1 = arith.constant 0 : i32
    return %c0_i32, %c0_i32_0 : i32, i32
  }
  func.func @transform_3(%arg0: i32) -> (i32, i32) {
    %c0_i32 = arith.constant 0 : i32
    %c0_i32_0 = arith.constant 0 : i32
    %c0_i32_1 = arith.constant 0 : i32
    return %c0_i32, %c0_i32_0 : i32, i32
  }
  func.func @transform_4(%arg0: i32) -> (i32, i32) {
    %c0_i32 = arith.constant 0 : i32
    %c0_i32_0 = arith.constant 0 : i32
    %c0_i32_1 = arith.constant 0 : i32
    return %c0_i32, %c0_i32_0 : i32, i32
  }
  func.func @transform_5(%arg0: i32) -> (i32, i32) {
    %c0_i32 = arith.constant 0 : i32
    %c0_i32_0 = arith.constant 0 : i32
    %c0_i32_1 = arith.constant 0 : i32
    return %c0_i32, %c0_i32_0 : i32, i32
  }
  func.func @transform_6(%arg0: i32) -> (i32, i32) {
    %c0_i32 = arith.constant 0 : i32
    %c0_i32_0 = arith.constant 0 : i32
    %c0_i32_1 = arith.constant 0 : i32
    return %c0_i32, %c0_i32_0 : i32, i32
  }
  func.func @transform_7(%arg0: i32) -> (i32, i32, i32) {
    %c0_i32 = arith.constant 0 : i32
    %c0_i32_0 = arith.constant 0 : i32
    %c0_i32_1 = arith.constant 0 : i32
    %c0_i32_2 = arith.constant 0 : i32
    return %c0_i32, %c0_i32_0, %c0_i32_1 : i32, i32, i32
  }
  func.func @transform_8(%arg0: i32) -> (i32, i32) {
    %c0_i32 = arith.constant 0 : i32
    %c0_i32_0 = arith.constant 0 : i32
    %c0_i32_1 = arith.constant 0 : i32
    return %c0_i32, %c0_i32_0 : i32, i32
  }
  func.func @transform_9(%arg0: i32) -> (i32, i32, i32) {
    %c0_i32 = arith.constant 0 : i32
    %c0_i32_0 = arith.constant 0 : i32
    %c0_i32_1 = arith.constant 0 : i32
    %c0_i32_2 = arith.constant 0 : i32
    return %c0_i32, %c0_i32_0, %c0_i32_1 : i32, i32, i32
  }
  func.func @transform_10(%arg0: i32) -> (i32, i32, i32) {
    %c0_i32 = arith.constant 0 : i32
    %c0_i32_0 = arith.constant 0 : i32
    %c0_i32_1 = arith.constant 0 : i32
    return %arg0, %c0_i32, %c0_i32_0 : i32, i32, i32
  }
  func.func @transform_11(%arg0: i32) -> (i32, i32, i32) {
    %c0_i32 = arith.constant 0 : i32
    %c0_i32_0 = arith.constant 0 : i32
    %c0_i32_1 = arith.constant 0 : i32
    return %arg0, %c0_i32, %c0_i32_0 : i32, i32, i32
  }
}

module attributes {stable_mosaic.version = 11 : i64} {
  func.func @_finalize_kernel(%arg0: i32, %arg1: memref<3xf32, #tpu.memory_space<smem>>, %arg2: memref<2x32x128xf32, #tpu.memory_space<vmem>>, %arg3: memref<2x32x128xf32, #tpu.memory_space<vmem>>) attributes {dimension_semantics = [#tpu.dimension_semantics<arbitrary>], iteration_bounds = array<i64: 1>, scalar_prefetch = 0 : i64, scratch_operands = 0 : i64, tpu.core_type = #tpu.core_type<tc>, window_params = [{transform_indices = @transform_0, window_bounds = array<i64: 3>}, {pipeline_mode = #tpu.pipeline_mode<synchronous>, transform_indices = @transform_1, window_bounds = array<i64: 2, 32, 128>}, {pipeline_mode = #tpu.pipeline_mode<synchronous>, transform_indices = @transform_2, window_bounds = array<i64: 2, 32, 128>}]} {
    %c0 = arith.constant 0 : index
    %c0_0 = arith.constant 0 : index
    %c0_1 = arith.constant 0 : index
    %0 = vector.load %arg2[%c0, %c0_0, %c0_1] : memref<2x32x128xf32, #tpu.memory_space<vmem>>, vector<2x32x128xf32>
    %c0_2 = arith.constant 0 : index
    %1 = memref.load %arg1[%c0_2] : memref<3xf32, #tpu.memory_space<smem>>
    %2 = vector.broadcast %1 : f32 to vector<2x32x128xf32>
    %3 = arith.addf %0, %2 : vector<2x32x128xf32>
    %c1 = arith.constant 1 : index
    %4 = memref.load %arg1[%c1] : memref<3xf32, #tpu.memory_space<smem>>
    %c2 = arith.constant 2 : index
    %5 = memref.load %arg1[%c2] : memref<3xf32, #tpu.memory_space<smem>>
    %6 = vector.broadcast %4 : f32 to vector<2x32x128xf32>
    %7 = arith.maximumf %6, %3 : vector<2x32x128xf32>
    %8 = vector.broadcast %5 : f32 to vector<2x32x128xf32>
    %9 = arith.minimumf %8, %7 : vector<2x32x128xf32>
    %c0_3 = arith.constant 0 : index
    %c0_4 = arith.constant 0 : index
    %c0_5 = arith.constant 0 : index
    %10 = vector.load %arg3[%c0_3, %c0_4, %c0_5] : memref<2x32x128xf32, #tpu.memory_space<vmem>>, vector<2x32x128xf32>
    tpu.vector_store %arg3[%c0_3, %c0_4, %c0_5], %9 {strides = array<i32>} : memref<2x32x128xf32, #tpu.memory_space<vmem>>, vector<2x32x128xf32>,
    return
  }
  func.func @transform_0(%arg0: i32) -> i32 {
    %c0_i32 = arith.constant 0 : i32
    %c0_i32_0 = arith.constant 0 : i32
    return %c0_i32 : i32
  }
  func.func @transform_1(%arg0: i32) -> (i32, i32, i32) {
    %c0_i32 = arith.constant 0 : i32
    %c0_i32_0 = arith.constant 0 : i32
    %c0_i32_1 = arith.constant 0 : i32
    %c0_i32_2 = arith.constant 0 : i32
    return %c0_i32, %c0_i32_0, %c0_i32_1 : i32, i32, i32
  }
  func.func @transform_2(%arg0: i32) -> (i32, i32, i32) {
    %c0_i32 = arith.constant 0 : i32
    %c0_i32_0 = arith.constant 0 : i32
    %c0_i32_1 = arith.constant 0 : i32
    %c0_i32_2 = arith.constant 0 : i32
    return %c0_i32, %c0_i32_0, %c0_i32_1 : i32, i32, i32
  }
}

</mosaic_0001>

<llo_original>
// kernel: fourier_unit_modified.3
$region0: #{fourier_unit_modified.3}
  #allocation0 [shape = 'u32[]', space=smem, size = 0x4, offset = 0x4, fixed_abs, tag = 'smem constant byte address 0x4 - core index']
  #allocation1 [shape = 'u32[144,128]{1,0:T(1,128)}', space=vmem, size = 0x12000, scoped, tag = 'internal scratch']
  %s0 = inlined_call_operand.vmem [shape: f32[3], index: 0, kind: input, shape index: {}]
  %s1 = inlined_call_operand.vmem [shape: f32[2,32,128], index: 1, kind: input, shape index: {}]
  %s2 = inlined_call_operand.vmem [shape: f32[2,32,128], index: 2, kind: output, shape index: {}]
  %s3 = sld [smem:[#allocation0]]
  $region22: #{fourier_unit_modified.3} parent=0
    _
  %s5 = ssub.s32 1, %s3
  %s6 = scalar_select 0, %s5, %s3
  $region1: #{fourier_unit_modified.3} parent=0
    #allocation2 [shape = 'u8[512]{0}', space=smem, size = 0x200, scoped, tag = 'input window, operand 0, single buffered']
    #allocation3 [shape = 's32[1]{0}', space=sflag, size = 0x4, scoped, tag = 'scoped memory for fourier_unit_modified.3']
    %7 = vsyncpa [#allocation3], 0
    // Predicated region
    $region2: #{fourier_unit_modified.3} parent=1 // pred_check
      _
    $region3: #{fourier_unit_modified.3} parent=1 // pred_check_branch
      %9 = sbr.rel (0) target = $region5
    $region4: #{fourier_unit_modified.3} parent=1 // pred_region
      %s11 = ssub.s32 16, 16
      %12 = vsyncadd [#allocation3], %s11
      %s14 = sshll.u32 %s0, 4
      %s15 = int_to_ptr.vmem [resolvable:$true] %s14
      %17 = dma.vmem_to_smem %s15, 16, [#allocation2], [#allocation3]
    $region5: #{fourier_unit_modified.3} parent=1 // pred_fallthru
      _
    // Predicated region
    $region6: #{fourier_unit_modified.3} parent=1 // pred_check
      _
    $region7: #{fourier_unit_modified.3} parent=1 // pred_check_branch
      %19 = sbr.rel (0) target = $region9
    $region8: #{fourier_unit_modified.3} parent=1 // pred_region
      _
    $region9: #{fourier_unit_modified.3} parent=1 // pred_fallthru
      _
    // Predicated region
    $region10: #{fourier_unit_modified.3} parent=1 // pred_check
      _
    $region11: #{fourier_unit_modified.3} parent=1 // pred_check_branch
      %21 = sbr.rel (0) target = $region13
    $region12: #{fourier_unit_modified.3} parent=1 // pred_region
      %22 = dma.done [#allocation3], 16
    $region13: #{fourier_unit_modified.3} parent=1 // pred_fallthru
      _
    %23 = sfence
    %v24 = vld [vmem:[%s1] sm:$0xff]
    %v25 = vld [vmem:[%s1 + $0x8] sm:$0xff]
    %v26 = vld [vmem:[%s1 + $0x10] sm:$0xff]
    %v27 = vld [vmem:[%s1 + $0x18] sm:$0xff]
    %v28 = vld [vmem:[%s1 + $0x20] sm:$0xff]
    %v29 = vld [vmem:[%s1 + $0x28] sm:$0xff]
    %v30 = vld [vmem:[%s1 + $0x30] sm:$0xff]
    %v31 = vld [vmem:[%s1 + $0x38] sm:$0xff]
    %s32 = sld [smem:[#allocation2]]
    %v33 = vstv %s32
    %v34 = vadd.f32 %v24, %v33
    %v35 = vadd.f32 %v25, %v33
    %v36 = vadd.f32 %v26, %v33
    %v37 = vadd.f32 %v27, %v33
    %v38 = vadd.f32 %v28, %v33
    %v39 = vadd.f32 %v29, %v33
    %v40 = vadd.f32 %v30, %v33
    %v41 = vadd.f32 %v31, %v33
    %s42 = sld [smem:[#allocation2 + $0x1]]
    %s43 = sld [smem:[#allocation2 + $0x2]]
    %v44 = vstv %s42
    %v45 = vmax.f32 %v44, %v34
    %v46 = vmax.f32 %v44, %v35
    %v47 = vmax.f32 %v44, %v36
    %v48 = vmax.f32 %v44, %v37
    %v49 = vmax.f32 %v44, %v38
    %v50 = vmax.f32 %v44, %v39
    %v51 = vmax.f32 %v44, %v40
    %v52 = vmax.f32 %v44, %v41
    %v53 = vstv %s43
    %v54 = vmin.f32 %v53, %v45
    %v55 = vmin.f32 %v53, %v46
    %v56 = vmin.f32 %v53, %v47
    %v57 = vmin.f32 %v53, %v48
    %v58 = vmin.f32 %v53, %v49
    %v59 = vmin.f32 %v53, %v50
    %v60 = vmin.f32 %v53, %v51
    %v61 = vmin.f32 %v53, %v52
    %62 = vst [vmem:[%s2] sm:$0xff] %v54
    %63 = vst [vmem:[%s2 + $0x8] sm:$0xff] %v55
    %64 = vst [vmem:[%s2 + $0x10] sm:$0xff] %v56
    %65 = vst [vmem:[%s2 + $0x18] sm:$0xff] %v57
    %66 = vst [vmem:[%s2 + $0x20] sm:$0xff] %v58
    %67 = vst [vmem:[%s2 + $0x28] sm:$0xff] %v59
    %68 = vst [vmem:[%s2 + $0x30] sm:$0xff] %v60
    %69 = vst [vmem:[%s2 + $0x38] sm:$0xff] %v61
    // Predicated region
    $region14: #{fourier_unit_modified.3} parent=1 // pred_check
      _
    $region15: #{fourier_unit_modified.3} parent=1 // pred_check_branch
      %71 = sbr.rel (0) target = $region17
    $region16: #{fourier_unit_modified.3} parent=1 // pred_region
      _
    $region17: #{fourier_unit_modified.3} parent=1 // pred_fallthru
      _
    // Predicated region
    $region18: #{fourier_unit_modified.3} parent=1 // pred_check
      _
    $region19: #{fourier_unit_modified.3} parent=1 // pred_check_branch
      %73 = sbr.rel (0) target = $region21
    $region20: #{fourier_unit_modified.3} parent=1 // pred_region
      _
    $region21: #{fourier_unit_modified.3} parent=1 // pred_fallthru
      _
    %74 = vsyncpa [#allocation3], 1

// kernel: fourier_unit_modified.2
$region0: #{fourier_unit_modified.2}
  #allocation0 [shape = 'u32[]', space=smem, size = 0x4, offset = 0x4, fixed_abs, tag = 'smem constant byte address 0x4 - core index']
  #allocation1 [shape = 'u32[144,128]{1,0:T(1,128)}', space=vmem, size = 0x12000, scoped, tag = 'internal scratch']
  #allocation2 [shape = 'f32[1]{0:T(128)S(6)}', space=smem, size = 0x200, scoped, tag = 'scoped memory for fourier_unit_modified.2']
  %s0 = inlined_call_operand.<no memory space> [shape: f32[1], index: 0, kind: input, shape index: {}]
  %s1 = inlined_call_operand.vmem [shape: f32[2,32,128], index: 1, kind: input, shape index: {}]
  %s2 = inlined_call_operand.vmem [shape: f32[32,17], index: 2, kind: input, shape index: {}]
  %s3 = inlined_call_operand.vmem [shape: f32[64,32], index: 3, kind: input, shape index: {}]
  %s4 = inlined_call_operand.vmem [shape: f32[128,136], index: 4, kind: input, shape index: {}]
  %s5 = inlined_call_operand.vmem [shape: f32[128,136], index: 5, kind: input, shape index: {}]
  %s6 = inlined_call_operand.vmem [shape: f32[153,136], index: 6, kind: input, shape index: {}]
  %s7 = inlined_call_operand.vmem [shape: f32[3,153,136], index: 7, kind: input, shape index: {}]
  %s8 = inlined_call_operand.vmem [shape: f32[64,32], index: 8, kind: input, shape index: {}]
  %s9 = inlined_call_operand.vmem [shape: f32[2,136,128], index: 9, kind: input, shape index: {}]
  %s10 = inlined_call_operand.vmem [shape: f32[2,32,128], index: 10, kind: output, shape index: {0}]
  %s11 = inlined_call_operand.vmem [shape: f32[2,4,128], index: 11, kind: output, shape index: {1}]
  %12 = xla_tuple %s10, %s11
  %s13 = sld [smem:[#allocation0]]
  $region81: #{fourier_unit_modified.2} parent=0
    _
  %s15 = ssub.s32 1, %s13
  %s16 = scalar_select 0, %s15, %s13
  %17 = sst [smem:[#allocation2]] %s0
  loop: start=0, step=1, limit=4
  $region2: #{fourier_unit_modified.2} parent=0 // loop_pre_header
    _
  $region3: #{fourier_unit_modified.2} parent=0 // loop_header
    %s19 = sphi 0, %s23
    %p20 = scmp.ge.s32.totalorder %s19, 4
    %s27 = sphi 0, %s27
    %s29 = sphi 0, %s27
    %s30 = sphi 0, %s29
    %s44 = sphi 0, %s30
    %s50 = sphi 0, %s52
    %s53 = sphi 0, %s50
    %s54 = sphi 0, %s53
    %s70 = sphi 0, %s54
    %s74 = sphi 0, %s74
    %s76 = sphi 0, %s74
    %s77 = sphi 0, %s76
    %s91 = sphi 0, %s77
    %s95 = sphi 0, %s95
    %s97 = sphi 0, %s95
    %s98 = sphi 0, %s97
    %s112 = sphi 0, %s98
    %s116 = sphi 0, %s116
    %s118 = sphi 0, %s116
    %s119 = sphi 0, %s118
    %s133 = sphi 0, %s119
    %s137 = sphi 0, %s137
    %s139 = sphi 0, %s137
    %s140 = sphi 0, %s139
    %s154 = sphi 0, %s140
    %s158 = sphi 0, %s158
    %s160 = sphi 0, %s158
    %s161 = sphi 0, %s160
    %s175 = sphi 0, %s161
    %s179 = sphi 0, %s179
    %s181 = sphi 0, %s179
    %s182 = sphi 0, %s181
    %s196 = sphi 0, %s182
    %s200 = sphi 0, %s200
    %s202 = sphi 0, %s200
    %s203 = sphi 0, %s202
    %s217 = sphi 0, %s203
    %s221 = sphi 0, %s221
    %s223 = sphi 0, %s221
    %s224 = sphi 0, %s223
    %s238 = sphi 0, %s224
    %s244 = sphi 0, %s246
    %s247 = sphi 0, %s244
    %s248 = sphi 0, %s247
    %s264 = sphi 0, %s248
    %s270 = sphi 0, %s272
    %s273 = sphi 0, %s270
    %s274 = sphi 0, %s273
    %s290 = sphi 0, %s274
  $region4: #{fourier_unit_modified.2} parent=0 // loop_header_branch
    %22 = sbr.rel (%p20) target = $region8
  $region5: #{fourier_unit_modified.2} parent=0 // loop_body
    %s24 = ssub.s32 %s19, 1
    %s25 = ssub.s32 %s19, 2
    %s26 = sadd.s32 %s19, 1
    %s28 = sadd.s32 %s27, 1
    %p31 = scmp.eq.s32.totalorder %s19, 1
    %p32 = scmp.ne.s32.totalorder %s27, %s29
    %p33 = scmp.eq.s32.totalorder %s19, 0
    %p34 = por %p32, %p33
    %p35 = scmp.ne.s32.totalorder %s27, %s29
    %p36 = scmp.eq.s32.totalorder %s24, 1
    %p37 = por %p35, %p36
    %p38 = scmp.ne.s32.totalorder %s29, %s30
    %p39 = scmp.eq.s32.totalorder %s24, 0
    %p40 = por %p38, %p39
    %p41 = scmp.ne.s32.totalorder %s29, %s30
    %p42 = scmp.eq.s32.totalorder %s25, 1
    %p43 = por %p41, %p42
    %p45 = scmp.ne.s32.totalorder %s30, %s44
    %p46 = scmp.eq.s32.totalorder %s25, 0
    %p47 = por %p45, %p46
    %s48 = ssub.s32 %s19, %s26
    %p49 = scmp.eq.s32.totalorder %s48, 0
    %s51 = sadd.s32 %s50, 1
    %s52 = scalar_select %p49, %s50, %s51
    %p55 = pneg %p49
    %p56 = scmp.eq.s32.totalorder %s19, 1
    %p57 = por %p55, %p56
    %p58 = scmp.ne.s32.totalorder %s50, %s53
    %p59 = scmp.eq.s32.totalorder %s19, 0
    %p60 = por %p58, %p59
    %p61 = scmp.ne.s32.totalorder %s50, %s53
    %p62 = scmp.eq.s32.totalorder %s24, 1
    %p63 = por %p61, %p62
    %p64 = scmp.ne.s32.totalorder %s53, %s54
    %p65 = scmp.eq.s32.totalorder %s24, 0
    %p66 = por %p64, %p65
    %p67 = scmp.ne.s32.totalorder %s53, %s54
    %p68 = scmp.eq.s32.totalorder %s25, 1
    %p69 = por %p67, %p68
    %p71 = scmp.ne.s32.totalorder %s54, %s70
    %p72 = scmp.eq.s32.totalorder %s25, 0
    %p73 = por %p71, %p72
    %s75 = sadd.s32 %s74, 1
    %p78 = scmp.eq.s32.totalorder %s19, 1
    %p79 = scmp.ne.s32.totalorder %s74, %s76
    %p80 = scmp.eq.s32.totalorder %s19, 0
    %p81 = por %p79, %p80
    %p82 = scmp.ne.s32.totalorder %s74, %s76
    %p83 = scmp.eq.s32.totalorder %s24, 1
    %p84 = por %p82, %p83
    %p85 = scmp.ne.s32.totalorder %s76, %s77
    %p86 = scmp.eq.s32.totalorder %s24, 0
    %p87 = por %p85, %p86
    %p88 = scmp.ne.s32.totalorder %s76, %s77
    %p89 = scmp.eq.s32.totalorder %s25, 1
    %p90 = por %p88, %p89
    %p92 = scmp.ne.s32.totalorder %s77, %s91
    %p93 = scmp.eq.s32.totalorder %s25, 0
    %p94 = por %p92, %p93
    %s96 = sadd.s32 %s95, 1
    %p99 = scmp.eq.s32.totalorder %s19, 1
    %p100 = scmp.ne.s32.totalorder %s95, %s97
    %p101 = scmp.eq.s32.totalorder %s19, 0
    %p102 = por %p100, %p101
    %p103 = scmp.ne.s32.totalorder %s95, %s97
    %p104 = scmp.eq.s32.totalorder %s24, 1
    %p105 = por %p103, %p104
    %p106 = scmp.ne.s32.totalorder %s97, %s98
    %p107 = scmp.eq.s32.totalorder %s24, 0
    %p108 = por %p106, %p107
    %p109 = scmp.ne.s32.totalorder %s97, %s98
    %p110 = scmp.eq.s32.totalorder %s25, 1
    %p111 = por %p109, %p110
    %p113 = scmp.ne.s32.totalorder %s98, %s112
    %p114 = scmp.eq.s32.totalorder %s25, 0
    %p115 = por %p113, %p114
    %s117 = sadd.s32 %s116, 1
    %p120 = scmp.eq.s32.totalorder %s19, 1
    %p121 = scmp.ne.s32.totalorder %s116, %s118
    %p122 = scmp.eq.s32.totalorder %s19, 0
    %p123 = por %p121, %p122
    %p124 = scmp.ne.s32.totalorder %s116, %s118
    %p125 = scmp.eq.s32.totalorder %s24, 1
    %p126 = por %p124, %p125
    %p127 = scmp.ne.s32.totalorder %s118, %s119
    %p128 = scmp.eq.s32.totalorder %s24, 0
    %p129 = por %p127, %p128
    %p130 = scmp.ne.s32.totalorder %s118, %s119
    %p131 = scmp.eq.s32.totalorder %s25, 1
    %p132 = por %p130, %p131
    %p134 = scmp.ne.s32.totalorder %s119, %s133
    %p135 = scmp.eq.s32.totalorder %s25, 0
    %p136 = por %p134, %p135
    %s138 = sadd.s32 %s137, 1
    %p141 = scmp.eq.s32.totalorder %s19, 1
    %p142 = scmp.ne.s32.totalorder %s137, %s139
    %p143 = scmp.eq.s32.totalorder %s19, 0
    %p144 = por %p142, %p143
    %p145 = scmp.ne.s32.totalorder %s137, %s139
    %p146 = scmp.eq.s32.totalorder %s24, 1
    %p147 = por %p145, %p146
    %p148 = scmp.ne.s32.totalorder %s139, %s140
    %p149 = scmp.eq.s32.totalorder %s24, 0
    %p150 = por %p148, %p149
    %p151 = scmp.ne.s32.totalorder %s139, %s140
    %p152 = scmp.eq.s32.totalorder %s25, 1
    %p153 = por %p151, %p152
    %p155 = scmp.ne.s32.totalorder %s140, %s154
    %p156 = scmp.eq.s32.totalorder %s25, 0
    %p157 = por %p155, %p156
    %s159 = sadd.s32 %s158, 1
    %p162 = scmp.eq.s32.totalorder %s19, 1
    %p163 = scmp.ne.s32.totalorder %s158, %s160
    %p164 = scmp.eq.s32.totalorder %s19, 0
    %p165 = por %p163, %p164
    %p166 = scmp.ne.s32.totalorder %s158, %s160
    %p167 = scmp.eq.s32.totalorder %s24, 1
    %p168 = por %p166, %p167
    %p169 = scmp.ne.s32.totalorder %s160, %s161
    %p170 = scmp.eq.s32.totalorder %s24, 0
    %p171 = por %p169, %p170
    %p172 = scmp.ne.s32.totalorder %s160, %s161
    %p173 = scmp.eq.s32.totalorder %s25, 1
    %p174 = por %p172, %p173
    %p176 = scmp.ne.s32.totalorder %s161, %s175
    %p177 = scmp.eq.s32.totalorder %s25, 0
    %p178 = por %p176, %p177
    %s180 = sadd.s32 %s179, 1
    %p183 = scmp.eq.s32.totalorder %s19, 1
    %p184 = scmp.ne.s32.totalorder %s179, %s181
    %p185 = scmp.eq.s32.totalorder %s19, 0
    %p186 = por %p184, %p185
    %p187 = scmp.ne.s32.totalorder %s179, %s181
    %p188 = scmp.eq.s32.totalorder %s24, 1
    %p189 = por %p187, %p188
    %p190 = scmp.ne.s32.totalorder %s181, %s182
    %p191 = scmp.eq.s32.totalorder %s24, 0
    %p192 = por %p190, %p191
    %p193 = scmp.ne.s32.totalorder %s181, %s182
    %p194 = scmp.eq.s32.totalorder %s25, 1
    %p195 = por %p193, %p194
    %p197 = scmp.ne.s32.totalorder %s182, %s196
    %p198 = scmp.eq.s32.totalorder %s25, 0
    %p199 = por %p197, %p198
    %s201 = sadd.s32 %s200, 1
    %p204 = scmp.eq.s32.totalorder %s19, 1
    %p205 = scmp.ne.s32.totalorder %s200, %s202
    %p206 = scmp.eq.s32.totalorder %s19, 0
    %p207 = por %p205, %p206
    %p208 = scmp.ne.s32.totalorder %s200, %s202
    %p209 = scmp.eq.s32.totalorder %s24, 1
    %p210 = por %p208, %p209
    %p211 = scmp.ne.s32.totalorder %s202, %s203
    %p212 = scmp.eq.s32.totalorder %s24, 0
    %p213 = por %p211, %p212
    %p214 = scmp.ne.s32.totalorder %s202, %s203
    %p215 = scmp.eq.s32.totalorder %s25, 1
    %p216 = por %p214, %p215
    %p218 = scmp.ne.s32.totalorder %s203, %s217
    %p219 = scmp.eq.s32.totalorder %s25, 0
    %p220 = por %p218, %p219
    %s222 = sadd.s32 %s221, 1
    %p225 = scmp.eq.s32.totalorder %s19, 1
    %p226 = scmp.ne.s32.totalorder %s221, %s223
    %p227 = scmp.eq.s32.totalorder %s19, 0
    %p228 = por %p226, %p227
    %p229 = scmp.ne.s32.totalorder %s221, %s223
    %p230 = scmp.eq.s32.totalorder %s24, 1
    %p231 = por %p229, %p230
    %p232 = scmp.ne.s32.totalorder %s223, %s224
    %p233 = scmp.eq.s32.totalorder %s24, 0
    %p234 = por %p232, %p233
    %p235 = scmp.ne.s32.totalorder %s223, %s224
    %p236 = scmp.eq.s32.totalorder %s25, 1
    %p237 = por %p235, %p236
    %p239 = scmp.ne.s32.totalorder %s224, %s238
    %p240 = scmp.eq.s32.totalorder %s25, 0
    %p241 = por %p239, %p240
    %s242 = ssub.s32 %s19, %s26
    %p243 = scmp.eq.s32.totalorder %s242, 0
    %s245 = sadd.s32 %s244, 1
    %s246 = scalar_select %p243, %s244, %s245
    %p249 = pneg %p243
    %p250 = scmp.eq.s32.totalorder %s19, 1
    %p251 = por %p249, %p250
    %p252 = scmp.ne.s32.totalorder %s244, %s247
    %p253 = scmp.eq.s32.totalorder %s19, 0
    %p254 = por %p252, %p253
    %p255 = scmp.ne.s32.totalorder %s244, %s247
    %p256 = scmp.eq.s32.totalorder %s24, 1
    %p257 = por %p255, %p256
    %p258 = scmp.ne.s32.totalorder %s247, %s248
    %p259 = scmp.eq.s32.totalorder %s24, 0
    %p260 = por %p258, %p259
    %p261 = scmp.ne.s32.totalorder %s247, %s248
    %p262 = scmp.eq.s32.totalorder %s25, 1
    %p263 = por %p261, %p262
    %p265 = scmp.ne.s32.totalorder %s248, %s264
    %p266 = scmp.eq.s32.totalorder %s25, 0
    %p267 = por %p265, %p266
    %s268 = ssub.s32 %s19, %s26
    %p269 = scmp.eq.s32.totalorder %s268, 0
    %s271 = sadd.s32 %s270, 1
    %s272 = scalar_select %p269, %s270, %s271
    %p275 = pneg %p269
    %p276 = scmp.eq.s32.totalorder %s19, 1
    %p277 = por %p275, %p276
    %p278 = scmp.ne.s32.totalorder %s270, %s273
    %p279 = scmp.eq.s32.totalorder %s19, 0
    %p280 = por %p278, %p279
    %p281 = scmp.ne.s32.totalorder %s270, %s273
    %p282 = scmp.eq.s32.totalorder %s24, 1
    %p283 = por %p281, %p282
    %p284 = scmp.ne.s32.totalorder %s273, %s274
    %p285 = scmp.eq.s32.totalorder %s24, 0
    %p286 = por %p284, %p285
    %p287 = scmp.ne.s32.totalorder %s273, %s274
    %p288 = scmp.eq.s32.totalorder %s25, 1
    %p289 = por %p287, %p288
    %p291 = scmp.ne.s32.totalorder %s274, %s290
    %p292 = scmp.eq.s32.totalorder %s25, 0
    %p293 = por %p291, %p292
    %p294 = scmp.le.s32.totalorder 1, %s19
    %p295 = scmp.lt.s32.totalorder %s19, 3
    %p296 = pnand %p294, %p295
    %p297 = pneg %p296
    // Predicated region
    $region9: #{fourier_unit_modified.2} parent=5 // pred_check
      _
    $region10: #{fourier_unit_modified.2} parent=5 // pred_check_branch
      %299 = sbr.rel (%p296) target = $region12
    $region11: #{fourier_unit_modified.2} parent=5 // pred_region
      %s300 = ssub.s32 %s19, 1
      // Predicated region
      $region13: #{fourier_unit_modified.2} parent=11 // pred_check
        %p301 = pneg %p40
      $region14: #{fourier_unit_modified.2} parent=11 // pred_check_branch
        %303 = sbr.rel (%p301) target = $region16
      $region15: #{fourier_unit_modified.2} parent=11 // pred_region
        _
      $region16: #{fourier_unit_modified.2} parent=11 // pred_fallthru
        _
      // Predicated region
      $region17: #{fourier_unit_modified.2} parent=11 // pred_check
        %p304 = pneg %p87
      $region18: #{fourier_unit_modified.2} parent=11 // pred_check_branch
        %306 = sbr.rel (%p304) target = $region20
      $region19: #{fourier_unit_modified.2} parent=11 // pred_region
        _
      $region20: #{fourier_unit_modified.2} parent=11 // pred_fallthru
        _
      // Predicated region
      $region21: #{fourier_unit_modified.2} parent=11 // pred_check
        %p307 = pneg %p108
      $region22: #{fourier_unit_modified.2} parent=11 // pred_check_branch
        %309 = sbr.rel (%p307) target = $region24
      $region23: #{fourier_unit_modified.2} parent=11 // pred_region
        _
      $region24: #{fourier_unit_modified.2} parent=11 // pred_fallthru
        _
      // Predicated region
      $region25: #{fourier_unit_modified.2} parent=11 // pred_check
        %p310 = pneg %p129
      $region26: #{fourier_unit_modified.2} parent=11 // pred_check_branch
        %312 = sbr.rel (%p310) target = $region28
      $region27: #{fourier_unit_modified.2} parent=11 // pred_region
        _
      $region28: #{fourier_unit_modified.2} parent=11 // pred_fallthru
        _
      // Predicated region
      $region29: #{fourier_unit_modified.2} parent=11 // pred_check
        %p313 = pneg %p150
      $region30: #{fourier_unit_modified.2} parent=11 // pred_check_branch
        %315 = sbr.rel (%p313) target = $region32
      $region31: #{fourier_unit_modified.2} parent=11 // pred_region
        _
      $region32: #{fourier_unit_modified.2} parent=11 // pred_fallthru
        _
      // Predicated region
      $region33: #{fourier_unit_modified.2} parent=11 // pred_check
        %p316 = pneg %p171
      $region34: #{fourier_unit_modified.2} parent=11 // pred_check_branch
        %318 = sbr.rel (%p316) target = $region36
      $region35: #{fourier_unit_modified.2} parent=11 // pred_region
        _
      $region36: #{fourier_unit_modified.2} parent=11 // pred_fallthru
        _
      // Predicated region
      $region37: #{fourier_unit_modified.2} parent=11 // pred_check
        %p319 = pneg %p192
      $region38: #{fourier_unit_modified.2} parent=11 // pred_check_branch
        %321 = sbr.rel (%p319) target = $region40
      $region39: #{fourier_unit_modified.2} parent=11 // pred_region
        _
      $region40: #{fourier_unit_modified.2} parent=11 // pred_fallthru
        _
      // Predicated region
      $region41: #{fourier_unit_modified.2} parent=11 // pred_check
        %p322 = pneg %p213
      $region42: #{fourier_unit_modified.2} parent=11 // pred_check_branch
        %324 = sbr.rel (%p322) target = $region44
      $region43: #{fourier_unit_modified.2} parent=11 // pred_region
        _
      $region44: #{fourier_unit_modified.2} parent=11 // pred_fallthru
        _
      // Predicated region
      $region45: #{fourier_unit_modified.2} parent=11 // pred_check
        %p325 = pneg %p234
      $region46: #{fourier_unit_modified.2} parent=11 // pred_check_branch
        %327 = sbr.rel (%p325) target = $region48
      $region47: #{fourier_unit_modified.2} parent=11 // pred_region
        _
      $region48: #{fourier_unit_modified.2} parent=11 // pred_fallthru
        _
    $region12: #{fourier_unit_modified.2} parent=5 // pred_fallthru
      _
    %p328 = scmp.lt.s32.totalorder %s19, 2
    // Predicated region
    $region49: #{fourier_unit_modified.2} parent=5 // pred_check
      %p329 = pneg %p328
    $region50: #{fourier_unit_modified.2} parent=5 // pred_check_branch
      %331 = sbr.rel (%p329) target = $region52
    $region51: #{fourier_unit_modified.2} parent=5 // pred_region
      // Predicated region
      $region53: #{fourier_unit_modified.2} parent=51 // pred_check
        %p332 = pneg %p60
      $region54: #{fourier_unit_modified.2} parent=51 // pred_check_branch
        %334 = sbr.rel (%p332) target = $region56
      $region55: #{fourier_unit_modified.2} parent=51 // pred_region
        %p335 = scmp.lt.s32.totalorder %s19, 1
        %s336 = scalar_select %p335, %s19, 1
        %s337 = smul.addr %s336, 4
        %s338 = smul.addr %s337, 8
        %s339 = scalar_lea.vmem %s1, %s338
      $region56: #{fourier_unit_modified.2} parent=51 // pred_fallthru
        _
    $region52: #{fourier_unit_modified.2} parent=5 // pred_fallthru
      _
    %p340 = scmp.le.s32.totalorder 1, %s19
    %p341 = scmp.lt.s32.totalorder %s19, 3
    %p342 = pnand %p340, %p341
    %p343 = pneg %p342
    // Predicated region
    $region57: #{fourier_unit_modified.2} parent=5 // pred_check
      _
    $region58: #{fourier_unit_modified.2} parent=5 // pred_check_branch
      %345 = sbr.rel (%p342) target = $region60
    $region59: #{fourier_unit_modified.2} parent=5 // pred_region
      %s346 = ssub.s32 %s19, 1
      %p347 = pneg %p40
      %p348 = pneg %p37
      %p349 = scmp.lt.s32.totalorder %s24, 1
      %s350 = scalar_select %p349, %s24, 1
      %s351 = smul.addr %s350, 4
      %s352 = smul.addr %s351, 8
      %s353 = scalar_lea.vmem %s1, %s352
      %p354 = pneg %p66
      %p355 = pneg %p63
      %p356 = pneg %p87
      %p357 = pneg %p84
      %p358 = pneg %p108
      %p359 = pneg %p105
      %p360 = pneg %p129
      %p361 = pneg %p126
      %p362 = pneg %p150
      %p363 = pneg %p147
      %p364 = pneg %p171
      %p365 = pneg %p168
      %p366 = pneg %p192
      %p367 = pneg %p189
      %p368 = pneg %p213
      %p369 = pneg %p210
      %p370 = pneg %p234
      %p371 = pneg %p231
      %p372 = pneg %p260
      %p373 = pneg %p257
      %p374 = scmp.lt.s32.totalorder %s24, 1
      %s375 = scalar_select %p374, %s24, 1
      %s376 = smul.addr %s375, 4
      %s377 = smul.addr %s376, 8
      %s378 = scalar_lea.vmem %s10, %s377
      %p379 = pneg %p286
      %p380 = pneg %p283
      %p381 = scmp.lt.s32.totalorder %s24, 1
      %s382 = scalar_select %p381, %s24, 1
      %s383 = smul.addr %s382, 4
      %s384 = scalar_lea.vmem %s11, %s383
      %p385 = scmp.lt.s32.totalorder %s24, 1
      %s386 = scalar_select %p385, %s24, 1
      %s387 = smul.addr %s386, 4
      %s388 = smul.addr %s387, 8
      %s389 = scalar_lea.vmem %s1, %s388
      %p390 = scmp.lt.s32.totalorder %s24, 1
      %s391 = scalar_select %p390, %s24, 1
      %s392 = smul.addr %s391, 4
      %s393 = smul.addr %s392, 8
      %s394 = scalar_lea.vmem %s10, %s393
      %p395 = scmp.lt.s32.totalorder %s24, 1
      %s396 = scalar_select %p395, %s24, 1
      %s397 = smul.addr %s396, 4
      %s398 = scalar_lea.vmem %s11, %s397
      %v399 = vld [vmem:[%s389] sm:$0xff]
      %v400 = vld [vmem:[%s389 + $0x8] sm:$0xff]
      %v401 = vld [vmem:[%s389 + $0x10] sm:$0xff]
      %v402 = vld [vmem:[%s389 + $0x18] sm:$0xff]
      %s403 = sld [smem:[#allocation2]]
      %v404 = vld [vmem:[%s2] sm:$0xff]
      %v405 = vld [vmem:[%s2 + $0x8] sm:$0xff]
      %v406 = vld [vmem:[%s2 + $0x10] sm:$0xff]
      %v407 = vld [vmem:[%s2 + $0x18] sm:$0xff]
      %v408 = vld [vmem:[%s3] sm:$0xff]
      %v409 = vld [vmem:[%s3 + $0x8] sm:$0xff]
      %v410 = vld [vmem:[%s3 + $0x10] sm:$0xff]
      %v411 = vld [vmem:[%s3 + $0x18] sm:$0xff]
      %v412 = vld [vmem:[%s3 + $0x20] sm:$0xff]
      %v413 = vld [vmem:[%s3 + $0x28] sm:$0xff]
      %v414 = vld [vmem:[%s3 + $0x30] sm:$0xff]
      %v415 = vld [vmem:[%s3 + $0x38] sm:$0xff]
      %vm416 = vcmask 261120
      %v418 = vsel %vm416, %v408, 0
      %v421 = vsel %vm416, %v409, 0
      %v424 = vsel %vm416, %v410, 0
      %v427 = vsel %vm416, %v411, 0
      %v430 = vsel %vm416, %v412, 0
      %v433 = vsel %vm416, %v413, 0
      %v436 = vsel %vm416, %v414, 0
      %v439 = vsel %vm416, %v415, 0
      %441 = vmatprep.subr.mxu0 0.0
      %442 = vmatpush1.msra.mxu0 %v399
      %443 = vmatprep.subr.mxu0 0.0
      %444 = vmatpush1.msra.mxu0 %v400
      %445 = vmatprep.subr.mxu0 0.0
      %446 = vmatpush1.msra.mxu0 %v401
      %447 = vmatprep.subr.mxu0 0.0
      %448 = vmatpush1.msra.mxu0 %v402
      %449 = vmatprep.subr.mxu0 0.0
      %450 = vmatpush1.msra.mxu0 0.0
      %451 = vmatprep.subr.mxu0 0.0
      %452 = vmatpush1.msra.mxu0 0.0
      %453 = vmatprep.subr.mxu0 0.0
      %454 = vmatpush1.msra.mxu0 0.0
      %455 = vmatprep.subr.mxu0 0.0
      %456 = vmatpush1.msra.mxu0 0.0
      %457 = vmatprep.subr.mxu0 0.0
      %458 = vmatpush1.msra.mxu0 0.0
      %459 = vmatprep.subr.mxu0 0.0
      %460 = vmatpush1.msra.mxu0 0.0
      %461 = vmatprep.subr.mxu0 0.0
      %462 = vmatpush1.msra.mxu0 0.0
      %463 = vmatprep.subr.mxu0 0.0
      %464 = vmatpush1.msra.mxu0 0.0
      %465 = vmatprep.subr.mxu0 0.0
      %466 = vmatpush1.msra.mxu0 0.0
      %467 = vmatprep.subr.mxu0 0.0
      %468 = vmatpush1.msra.mxu0 0.0
      %469 = vmatprep.subr.mxu0 0.0
      %470 = vmatpush1.msra.mxu0 0.0
      %471 = vmatprep.subr.mxu0 0.0
      %472 = vmatpush1.msra.mxu0 0.0
      %473 = vmatprep.subr.mxu0 0.0
      %474 = vmatpush1.msra.mxu0 0.0
      %475 = vmatprep.subr.mxu0 0.0
      %476 = vmatpush1.msra.mxu0 0.0
      %477 = vmatprep.subr.mxu0 0.0
      %478 = vmatpush1.msra.mxu0 0.0
      %479 = vmatprep.subr.mxu0 0.0
      %480 = vmatpush1.msra.mxu0 0.0
      %481 = vmatprep.subr.mxu0 0.0
      %482 = vmatpush1.msra.mxu0 0.0
      %483 = vmatprep.subr.mxu0 0.0
      %484 = vmatpush1.msra.mxu0 0.0
      %485 = vmatprep.subr.mxu0 0.0
      %486 = vmatpush1.msra.mxu0 0.0
      %487 = vmatprep.subr.mxu0 0.0
      %488 = vmatpush1.msra.mxu0 0.0
      %489 = vmatprep.subr.mxu0 0.0
      %490 = vmatpush1.msra.mxu0 0.0
      %491 = vmatprep.subr.mxu0 0.0
      %492 = vmatpush1.msra.mxu0 0.0
      %493 = vmatprep.subr.mxu0 0.0
      %494 = vmatpush1.msra.mxu0 0.0
      %495 = vmatprep.subr.mxu0 0.0
      %496 = vmatpush1.msra.mxu0 0.0
      %497 = vmatprep.subr.mxu0 0.0
      %498 = vmatpush1.msra.mxu0 0.0
      %499 = vmatprep.subr.mxu0 0.0
      %500 = vmatpush1.msra.mxu0 0.0
      %501 = vmatprep.subr.mxu0 0.0
      %502 = vmatpush1.msra.mxu0 0.0
      %503 = vmatprep.subr.mxu0 0.0
      %504 = vmatpush1.msra.mxu0 0.0
      %505 = vmatprep.mubr.f32.mxu0 0.0
      %506 = vmatmul.mubr.f32.gmra.mrb[0].mxu0 %v418
      %v507 = vpop.f32.mrb[0].mxu0
      %v508 = vadd.f32 0.0, %v507
      %v509 = vpop.f32.mrb[0].mxu0
      %510 = vmatprep.mubr.f32.mxu0 0.0
      %511 = vmatmul.mubr.f32.gmra.mrb[0].mxu0 %v421
      %v512 = vpop.f32.mrb[0].mxu0
      %v513 = vadd.f32 0.0, %v512
      %v514 = vpop.f32.mrb[0].mxu0
      %515 = vmatprep.mubr.f32.mxu0 0.0
      %516 = vmatmul.mubr.f32.gmra.mrb[0].mxu0 %v424
      %v517 = vpop.f32.mrb[0].mxu0
      %v518 = vadd.f32 0.0, %v517
      %v519 = vpop.f32.mrb[0].mxu0
      %520 = vmatprep.mubr.f32.mxu0 0.0
      %521 = vmatmul.mubr.f32.gmra.mrb[0].mxu0 %v427
      %v522 = vpop.f32.mrb[0].mxu0
      %v523 = vadd.f32 0.0, %v522
      %v524 = vpop.f32.mrb[0].mxu0
      %525 = vmatprep.mubr.f32.mxu0 0.0
      %526 = vmatmul.mubr.f32.gmra.mrb[0].mxu0 %v430
      %v527 = vpop.f32.mrb[0].mxu0
      %v528 = vadd.f32 0.0, %v527
      %v529 = vpop.f32.mrb[0].mxu0
      %530 = vmatprep.mubr.f32.mxu0 0.0
      %531 = vmatmul.mubr.f32.gmra.mrb[0].mxu0 %v433
      %v532 = vpop.f32.mrb[0].mxu0
      %v533 = vadd.f32 0.0, %v532
      %v534 = vpop.f32.mrb[0].mxu0
      %535 = vmatprep.mubr.f32.mxu0 0.0
      %536 = vmatmul.mubr.f32.gmra.mrb[0].mxu0 %v436
      %v537 = vpop.f32.mrb[0].mxu0
      %v538 = vadd.f32 0.0, %v537
      %v539 = vpop.f32.mrb[0].mxu0
      %540 = vmatprep.mubr.f32.mxu0 0.0
      %541 = vmatmul.mubr.f32.gmra.mrb[0].mxu0 %v439
      %v542 = vpop.f32.mrb[0].mxu0
      %v543 = vadd.f32 0.0, %v542
      %v544 = vpop.f32.mrb[0].mxu0
      %545 = vdwg.mxu0
      %v546 = vld [vmem:[%s4] sm:$0xff]
      %v547 = vld [vmem:[%s4 + $0x8] sm:$0xff]
      %v548 = vld [vmem:[%s4 + $0x10] sm:$0xff]
      %v549 = vld [vmem:[%s4 + $0x18] sm:$0xff]
      %v550 = vld [vmem:[%s4 + $0x20] sm:$0xff]
      %v551 = vld [vmem:[%s4 + $0x28] sm:$0xff]
      %v552 = vld [vmem:[%s4 + $0x30] sm:$0xff]
      %v553 = vld [vmem:[%s4 + $0x38] sm:$0xff]
      %v554 = vld [vmem:[%s4 + $0x40] sm:$0xff]
      %v555 = vld [vmem:[%s4 + $0x48] sm:$0xff]
      %v556 = vld [vmem:[%s4 + $0x50] sm:$0xff]
      %v557 = vld [vmem:[%s4 + $0x58] sm:$0xff]
      %v558 = vld [vmem:[%s4 + $0x60] sm:$0xff]
      %v559 = vld [vmem:[%s4 + $0x68] sm:$0xff]
      %v560 = vld [vmem:[%s4 + $0x70] sm:$0xff]
      %v561 = vld [vmem:[%s4 + $0x78] sm:$0xff]
      %v562 = vld [vmem:[%s4 + $0x80] sm:$0xff]
      %v563 = vld [vmem:[%s4 + $0x88] sm:$0xff]
      %v564 = vld [vmem:[%s4 + $0x90] sm:$0xff]
      %v565 = vld [vmem:[%s4 + $0x98] sm:$0xff]
      %v566 = vld [vmem:[%s4 + $0xa0] sm:$0xff]
      %v567 = vld [vmem:[%s4 + $0xa8] sm:$0xff]
      %v568 = vld [vmem:[%s4 + $0xb0] sm:$0xff]
      %v569 = vld [vmem:[%s4 + $0xb8] sm:$0xff]
      %v570 = vld [vmem:[%s4 + $0xc0] sm:$0xff]
      %v571 = vld [vmem:[%s4 + $0xc8] sm:$0xff]
      %v572 = vld [vmem:[%s4 + $0xd0] sm:$0xff]
      %v573 = vld [vmem:[%s4 + $0xd8] sm:$0xff]
      %v574 = vld [vmem:[%s4 + $0xe0] sm:$0xff]
      %v575 = vld [vmem:[%s4 + $0xe8] sm:$0xff]
      %v576 = vld [vmem:[%s4 + $0xf0] sm:$0xff]
      %v577 = vld [vmem:[%s4 + $0xf8] sm:$0xff]
      %v578 = vld [vmem:[%s5] sm:$0xff]
      %v579 = vld [vmem:[%s5 + $0x8] sm:$0xff]
      %v580 = vld [vmem:[%s5 + $0x10] sm:$0xff]
      %v581 = vld [vmem:[%s5 + $0x18] sm:$0xff]
      %v582 = vld [vmem:[%s5 + $0x20] sm:$0xff]
      %v583 = vld [vmem:[%s5 + $0x28] sm:$0xff]
      %v584 = vld [vmem:[%s5 + $0x30] sm:$0xff]
      %v585 = vld [vmem:[%s5 + $0x38] sm:$0xff]
      %v586 = vld [vmem:[%s5 + $0x40] sm:$0xff]
      %v587 = vld [vmem:[%s5 + $0x48] sm:$0xff]
      %v588 = vld [vmem:[%s5 + $0x50] sm:$0xff]
      %v589 = vld [vmem:[%s5 + $0x58] sm:$0xff]
      %v590 = vld [vmem:[%s5 + $0x60] sm:$0xff]
      %v591 = vld [vmem:[%s5 + $0x68] sm:$0xff]
      %v592 = vld [vmem:[%s5 + $0x70] sm:$0xff]
      %v593 = vld [vmem:[%s5 + $0x78] sm:$0xff]
      %v594 = vld [vmem:[%s5 + $0x80] sm:$0xff]
      %v595 = vld [vmem:[%s5 + $0x88] sm:$0xff]
      %v596 = vld [vmem:[%s5 + $0x90] sm:$0xff]
      %v597 = vld [vmem:[%s5 + $0x98] sm:$0xff]
      %v598 = vld [vmem:[%s5 + $0xa0] sm:$0xff]
      %v599 = vld [vmem:[%s5 + $0xa8] sm:$0xff]
      %v600 = vld [vmem:[%s5 + $0xb0] sm:$0xff]
      %v601 = vld [vmem:[%s5 + $0xb8] sm:$0xff]
      %v602 = vld [vmem:[%s5 + $0xc0] sm:$0xff]
      %v603 = vld [vmem:[%s5 + $0xc8] sm:$0xff]
      %v604 = vld [vmem:[%s5 + $0xd0] sm:$0xff]
      %v605 = vld [vmem:[%s5 + $0xd8] sm:$0xff]
      %v606 = vld [vmem:[%s5 + $0xe0] sm:$0xff]
      %v607 = vld [vmem:[%s5 + $0xe8] sm:$0xff]
      %v608 = vld [vmem:[%s5 + $0xf0] sm:$0xff]
      %v609 = vld [vmem:[%s5 + $0xf8] sm:$0xff]
      %610 = vmatprep.subr.mxu0 %v579
      %611 = vmatpush1.msra.mxu0 %v578
      %612 = vmatprep.subr.mxu0 %v581
      %613 = vmatpush1.msra.mxu0 %v580
      %614 = vmatprep.subr.mxu0 %v583
      %615 = vmatpush1.msra.mxu0 %v582
      %616 = vmatprep.subr.mxu0 %v585
      %617 = vmatpush1.msra.mxu0 %v584
      %618 = vmatprep.subr.mxu0 %v587
      %619 = vmatpush1.msra.mxu0 %v586
      %620 = vmatprep.subr.mxu0 %v589
      %621 = vmatpush1.msra.mxu0 %v588
      %622 = vmatprep.subr.mxu0 %v591
      %623 = vmatpush1.msra.mxu0 %v590
      %624 = vmatprep.subr.mxu0 %v593
      %625 = vmatpush1.msra.mxu0 %v592
      %626 = vmatprep.subr.mxu0 %v595
      %627 = vmatpush1.msra.mxu0 %v594
      %628 = vmatprep.subr.mxu0 %v597
      %629 = vmatpush1.msra.mxu0 %v596
      %630 = vmatprep.subr.mxu0 %v599
      %631 = vmatpush1.msra.mxu0 %v598
      %632 = vmatprep.subr.mxu0 %v601
      %633 = vmatpush1.msra.mxu0 %v600
      %634 = vmatprep.subr.mxu0 %v603
      %635 = vmatpush1.msra.mxu0 %v602
      %636 = vmatprep.subr.mxu0 %v605
      %637 = vmatpush1.msra.mxu0 %v604
      %638 = vmatprep.subr.mxu0 %v607
      %639 = vmatpush1.msra.mxu0 %v606
      %640 = vmatprep.subr.mxu0 %v609
      %641 = vmatpush1.msra.mxu0 %v608
      %642 = vmatprep.subr.mxu0 0.0
      %643 = vmatpush1.msra.mxu0 0.0
      %644 = vmatprep.subr.mxu0 0.0
      %645 = vmatpush1.msra.mxu0 0.0
      %646 = vmatprep.subr.mxu0 0.0
      %647 = vmatpush1.msra.mxu0 0.0
      %648 = vmatprep.subr.mxu0 0.0
      %649 = vmatpush1.msra.mxu0 0.0
      %650 = vmatprep.subr.mxu0 0.0
      %651 = vmatpush1.msra.mxu0 0.0
      %652 = vmatprep.subr.mxu0 0.0
      %653 = vmatpush1.msra.mxu0 0.0
      %654 = vmatprep.subr.mxu0 0.0
      %655 = vmatpush1.msra.mxu0 0.0
      %656 = vmatprep.subr.mxu0 0.0
      %657 = vmatpush1.msra.mxu0 0.0
      %658 = vmatprep.subr.mxu0 0.0
      %659 = vmatpush1.msra.mxu0 0.0
      %660 = vmatprep.subr.mxu0 0.0
      %661 = vmatpush1.msra.mxu0 0.0
      %662 = vmatprep.subr.mxu0 0.0
      %663 = vmatpush1.msra.mxu0 0.0
      %664 = vmatprep.subr.mxu0 0.0
      %665 = vmatpush1.msra.mxu0 0.0
      %666 = vmatprep.subr.mxu0 0.0
      %667 = vmatpush1.msra.mxu0 0.0
      %668 = vmatprep.subr.mxu0 0.0
      %669 = vmatpush1.msra.mxu0 0.0
      %670 = vmatprep.subr.mxu0 0.0
      %671 = vmatpush1.msra.mxu0 0.0
      %672 = vmatprep.subr.mxu0 0.0
      %673 = vmatpush1.msra.mxu0 0.0
      %674 = vmatprep.mubr.f32.mxu0 0.0
      %675 = vmatmul.mubr.f32.gmra.mrb[0].mxu0 %v528
      %v676 = vpop.f32.mrb[0].mxu0
      %v677 = vadd.f32 0.0, %v676
      %v678 = vpop.f32.mrb[0].mxu0
      %v679 = vadd.f32 0.0, %v678
      %680 = vmatprep.mubr.f32.mxu0 0.0
      %681 = vmatmul.mubr.f32.gmra.mrb[0].mxu0 %v533
      %v682 = vpop.f32.mrb[0].mxu0
      %v683 = vadd.f32 0.0, %v682
      %v684 = vpop.f32.mrb[0].mxu0
      %v685 = vadd.f32 0.0, %v684
      %686 = vmatprep.mubr.f32.mxu0 0.0
      %687 = vmatmul.mubr.f32.gmra.mrb[0].mxu0 %v538
      %v688 = vpop.f32.mrb[0].mxu0
      %v689 = vadd.f32 0.0, %v688
      %v690 = vpop.f32.mrb[0].mxu0
      %v691 = vadd.f32 0.0, %v690
      %692 = vmatprep.mubr.f32.mxu0 0.0
      %693 = vmatmul.mubr.f32.gmra.mrb[0].mxu0 %v543
      %v694 = vpop.f32.mrb[0].mxu0
      %v695 = vadd.f32 0.0, %v694
      %v696 = vpop.f32.mrb[0].mxu0
      %v697 = vadd.f32 0.0, %v696
      %698 = vdwg.mxu0
      %699 = vmatprep.subr.mxu0 %v547
      %700 = vmatpush1.msra.mxu0 %v546
      %701 = vmatprep.subr.mxu0 %v549
      %702 = vmatpush1.msra.mxu0 %v548
      %703 = vmatprep.subr.mxu0 %v551
      %704 = vmatpush1.msra.mxu0 %v550
      %705 = vmatprep.subr.mxu0 %v553
      %706 = vmatpush1.msra.mxu0 %v552
      %707 = vmatprep.subr.mxu0 %v555
      %708 = vmatpush1.msra.mxu0 %v554
      %709 = vmatprep.subr.mxu0 %v557
      %710 = vmatpush1.msra.mxu0 %v556
      %711 = vmatprep.subr.mxu0 %v559
      %712 = vmatpush1.msra.mxu0 %v558
      %713 = vmatprep.subr.mxu0 %v561
      %714 = vmatpush1.msra.mxu0 %v560
      %715 = vmatprep.subr.mxu0 %v563
      %716 = vmatpush1.msra.mxu0 %v562
      %717 = vmatprep.subr.mxu0 %v565
      %718 = vmatpush1.msra.mxu0 %v564
      %719 = vmatprep.subr.mxu0 %v567
      %720 = vmatpush1.msra.mxu0 %v566
      %721 = vmatprep.subr.mxu0 %v569
      %722 = vmatpush1.msra.mxu0 %v568
      %723 = vmatprep.subr.mxu0 %v571
      %724 = vmatpush1.msra.mxu0 %v570
      %725 = vmatprep.subr.mxu0 %v573
      %726 = vmatpush1.msra.mxu0 %v572
      %727 = vmatprep.subr.mxu0 %v575
      %728 = vmatpush1.msra.mxu0 %v574
      %729 = vmatprep.subr.mxu0 %v577
      %730 = vmatpush1.msra.mxu0 %v576
      %731 = vmatprep.subr.mxu0 0.0
      %732 = vmatpush1.msra.mxu0 0.0
      %733 = vmatprep.subr.mxu0 0.0
      %734 = vmatpush1.msra.mxu0 0.0
      %735 = vmatprep.subr.mxu0 0.0
      %736 = vmatpush1.msra.mxu0 0.0
      %737 = vmatprep.subr.mxu0 0.0
      %738 = vmatpush1.msra.mxu0 0.0
      %739 = vmatprep.subr.mxu0 0.0
      %740 = vmatpush1.msra.mxu0 0.0
      %741 = vmatprep.subr.mxu0 0.0
      %742 = vmatpush1.msra.mxu0 0.0
      %743 = vmatprep.subr.mxu0 0.0
      %744 = vmatpush1.msra.mxu0 0.0
      %745 = vmatprep.subr.mxu0 0.0
      %746 = vmatpush1.msra.mxu0 0.0
      %747 = vmatprep.subr.mxu0 0.0
      %748 = vmatpush1.msra.mxu0 0.0
      %749 = vmatprep.subr.mxu0 0.0
      %750 = vmatpush1.msra.mxu0 0.0
      %751 = vmatprep.subr.mxu0 0.0
      %752 = vmatpush1.msra.mxu0 0.0
      %753 = vmatprep.subr.mxu0 0.0
      %754 = vmatpush1.msra.mxu0 0.0
      %755 = vmatprep.subr.mxu0 0.0
      %756 = vmatpush1.msra.mxu0 0.0
      %757 = vmatprep.subr.mxu0 0.0
      %758 = vmatpush1.msra.mxu0 0.0
      %759 = vmatprep.subr.mxu0 0.0
      %760 = vmatpush1.msra.mxu0 0.0
      %761 = vmatprep.subr.mxu0 0.0
      %762 = vmatpush1.msra.mxu0 0.0
      %763 = vmatprep.mubr.f32.mxu0 0.0
      %764 = vmatmul.mubr.f32.gmra.mrb[0].mxu0 %v508
      %v765 = vpop.f32.mrb[0].mxu0
      %v766 = vadd.f32 %v677, %v765
      %v767 = vpop.f32.mrb[0].mxu0
      %v768 = vadd.f32 %v679, %v767
      %769 = vmatprep.mubr.f32.mxu0 0.0
      %770 = vmatmul.mubr.f32.gmra.mrb[0].mxu0 %v513
      %v771 = vpop.f32.mrb[0].mxu0
      %v772 = vadd.f32 %v683, %v771
      %v773 = vpop.f32.mrb[0].mxu0
      %v774 = vadd.f32 %v685, %v773
      %775 = vmatprep.mubr.f32.mxu0 0.0
      %776 = vmatmul.mubr.f32.gmra.mrb[0].mxu0 %v518
      %v777 = vpop.f32.mrb[0].mxu0
      %v778 = vadd.f32 %v689, %v777
      %v779 = vpop.f32.mrb[0].mxu0
      %v780 = vadd.f32 %v691, %v779
      %781 = vmatprep.mubr.f32.mxu0 0.0
      %782 = vmatmul.mubr.f32.gmra.mrb[0].mxu0 %v523
      %v783 = vpop.f32.mrb[0].mxu0
      %v784 = vadd.f32 %v695, %v783
      %v785 = vpop.f32.mrb[0].mxu0
      %v786 = vadd.f32 %v697, %v785
      %787 = vdwg.mxu0
      %792 = vrot.lane.b32.xlu0 %v404, 8
      %v793 = vpop.permute.xlu0 %792
      %794 = vrot.lane.b32.xlu0 %v405, 8
      %v795 = vpop.permute.xlu0 %794
      %796 = vrot.lane.b32.xlu0 %v406, 8
      %v797 = vpop.permute.xlu0 %796
      %798 = vrot.lane.b32.xlu0 %v407, 8
      %v799 = vpop.permute.xlu0 %798
      %vm804 = vcmask 64512
      %v805 = vsel %vm804, %v768, %v793
      %v806 = vsel %vm804, %v774, %v795
      %v807 = vsel %vm804, %v780, %v797
      %v808 = vsel %vm804, %v786, %v799
      %v809 = vld [vmem:[%s6] sm:$0xff]
      %v810 = vld [vmem:[%s6 + $0x8] sm:$0xff]
      %v811 = vld [vmem:[%s6 + $0x10] sm:$0xff]
      %v812 = vld [vmem:[%s6 + $0x18] sm:$0xff]
      %v813 = vld [vmem:[%s6 + $0x20] sm:$0xff]
      %v814 = vld [vmem:[%s6 + $0x28] sm:$0xff]
      %v815 = vld [vmem:[%s6 + $0x30] sm:$0xff]
      %v816 = vld [vmem:[%s6 + $0x38] sm:$0xff]
      %v817 = vld [vmem:[%s6 + $0x40] sm:$0xff]
      %v818 = vld [vmem:[%s6 + $0x48] sm:$0xff]
      %v819 = vld [vmem:[%s6 + $0x50] sm:$0xff]
      %v820 = vld [vmem:[%s6 + $0x58] sm:$0xff]
      %v821 = vld [vmem:[%s6 + $0x60] sm:$0xff]
      %v822 = vld [vmem:[%s6 + $0x68] sm:$0xff]
      %v823 = vld [vmem:[%s6 + $0x70] sm:$0xff]
      %v824 = vld [vmem:[%s6 + $0x78] sm:$0xff]
      %v825 = vld [vmem:[%s6 + $0x80] sm:$0xff]
      %v826 = vld [vmem:[%s6 + $0x88] sm:$0xff]
      %v827 = vld [vmem:[%s6 + $0x90] sm:$0xff]
      %v828 = vld [vmem:[%s6 + $0x98] sm:$0xff]
      %v829 = vld [vmem:[%s6 + $0xa0] sm:$0xff]
      %v830 = vld [vmem:[%s6 + $0xa8] sm:$0xff]
      %v831 = vld [vmem:[%s6 + $0xb0] sm:$0xff]
      %v832 = vld [vmem:[%s6 + $0xb8] sm:$0xff]
      %v833 = vld [vmem:[%s6 + $0xc0] sm:$0xff]
      %v834 = vld [vmem:[%s6 + $0xc8] sm:$0xff]
      %v835 = vld [vmem:[%s6 + $0xd0] sm:$0xff]
      %v836 = vld [vmem:[%s6 + $0xd8] sm:$0xff]
      %v837 = vld [vmem:[%s6 + $0xe0] sm:$0xff]
      %v838 = vld [vmem:[%s6 + $0xe8] sm:$0xff]
      %v839 = vld [vmem:[%s6 + $0xf0] sm:$0xff]
      %v840 = vld [vmem:[%s6 + $0xf8] sm:$0xff]
      %v841 = vld [vmem:[%s6 + $0x100] sm:$0xff]
      %v842 = vld [vmem:[%s6 + $0x108] sm:$0xff]
      %v843 = vld [vmem:[%s6 + $0x110] sm:$0xff]
      %v844 = vld [vmem:[%s6 + $0x118] sm:$0xff]
      %v845 = vld [vmem:[%s6 + $0x120] sm:$0xff]
      %v846 = vld [vmem:[%s6 + $0x128] sm:$0xff]
      %v847 = vld [vmem:[%s6 + $0x130] sm:$0x1]
      %v848 = vld [vmem:[%s6 + $0x138] sm:$0x1]
      %vm849 = vcmask 203776
      %v851 = vsel %vm849, %v805, 0
      %v854 = vsel %vm849, %v806, 0
      %v857 = vsel %vm849, %v807, 0
      %v860 = vsel %vm849, %v808, 0
      %vm862 = vcmask 1040384
      %v864 = vsel %vm862, %v847, 0
      %v867 = vsel %vm862, %v848, 0
      %869 = vmatprep.subr.mxu0 %v810
      %870 = vmatpush1.msra.mxu0 %v809
      %871 = vmatprep.subr.mxu0 %v812
      %872 = vmatpush1.msra.mxu0 %v811
      %873 = vmatprep.subr.mxu0 %v814
      %874 = vmatpush1.msra.mxu0 %v813
      %875 = vmatprep.subr.mxu0 %v816
      %876 = vmatpush1.msra.mxu0 %v815
      %877 = vmatprep.subr.mxu0 %v818
      %878 = vmatpush1.msra.mxu0 %v817
      %879 = vmatprep.subr.mxu0 %v820
      %880 = vmatpush1.msra.mxu0 %v819
      %881 = vmatprep.subr.mxu0 %v822
      %882 = vmatpush1.msra.mxu0 %v821
      %883 = vmatprep.subr.mxu0 %v824
      %884 = vmatpush1.msra.mxu0 %v823
      %885 = vmatprep.subr.mxu0 %v826
      %886 = vmatpush1.msra.mxu0 %v825
      %887 = vmatprep.subr.mxu0 %v828
      %888 = vmatpush1.msra.mxu0 %v827
      %889 = vmatprep.subr.mxu0 %v830
      %890 = vmatpush1.msra.mxu0 %v829
      %891 = vmatprep.subr.mxu0 %v832
      %892 = vmatpush1.msra.mxu0 %v831
      %893 = vmatprep.subr.mxu0 %v834
      %894 = vmatpush1.msra.mxu0 %v833
      %895 = vmatprep.subr.mxu0 %v836
      %896 = vmatpush1.msra.mxu0 %v835
      %897 = vmatprep.subr.mxu0 %v838
      %898 = vmatpush1.msra.mxu0 %v837
      %899 = vmatprep.subr.mxu0 %v840
      %900 = vmatpush1.msra.mxu0 %v839
      %901 = vmatprep.subr.mxu0 %v842
      %902 = vmatpush1.msra.mxu0 %v841
      %903 = vmatprep.subr.mxu0 %v844
      %904 = vmatpush1.msra.mxu0 %v843
      %905 = vmatprep.subr.mxu0 %v846
      %906 = vmatpush1.msra.mxu0 %v845
      %907 = vmatprep.subr.mxu0 %v867
      %908 = vmatpush1.msra.mxu0 %v864
      %909 = vmatprep.subr.mxu0 0.0
      %910 = vmatpush1.msra.mxu0 0.0
      %911 = vmatprep.subr.mxu0 0.0
      %912 = vmatpush1.msra.mxu0 0.0
      %913 = vmatprep.subr.mxu0 0.0
      %914 = vmatpush1.msra.mxu0 0.0
      %915 = vmatprep.subr.mxu0 0.0
      %916 = vmatpush1.msra.mxu0 0.0
      %917 = vmatprep.subr.mxu0 0.0
      %918 = vmatpush1.msra.mxu0 0.0
      %919 = vmatprep.subr.mxu0 0.0
      %920 = vmatpush1.msra.mxu0 0.0
      %921 = vmatprep.subr.mxu0 0.0
      %922 = vmatpush1.msra.mxu0 0.0
      %923 = vmatprep.subr.mxu0 0.0
      %924 = vmatpush1.msra.mxu0 0.0
      %925 = vmatprep.subr.mxu0 0.0
      %926 = vmatpush1.msra.mxu0 0.0
      %927 = vmatprep.subr.mxu0 0.0
      %928 = vmatpush1.msra.mxu0 0.0
      %929 = vmatprep.subr.mxu0 0.0
      %930 = vmatpush1.msra.mxu0 0.0
      %931 = vmatprep.subr.mxu0 0.0
      %932 = vmatpush1.msra.mxu0 0.0
      %933 = vmatprep.mubr.f32.mxu0 %v851
      %934 = vmatmul.mubr.f32.gmra.mrb[0].mxu0 %v766
      %v935 = vpop.f32.mrb[0].mxu0
      %v936 = vadd.f32 0.0, %v935
      %v937 = vpop.f32.mrb[0].mxu0
      %v938 = vadd.f32 0.0, %v937
      %939 = vmatprep.mubr.f32.mxu0 %v854
      %940 = vmatmul.mubr.f32.gmra.mrb[0].mxu0 %v772
      %v941 = vpop.f32.mrb[0].mxu0
      %v942 = vadd.f32 0.0, %v941
      %v943 = vpop.f32.mrb[0].mxu0
      %v944 = vadd.f32 0.0, %v943
      %945 = vmatprep.mubr.f32.mxu0 %v857
      %946 = vmatmul.mubr.f32.gmra.mrb[0].mxu0 %v778
      %v947 = vpop.f32.mrb[0].mxu0
      %v948 = vadd.f32 0.0, %v947
      %v949 = vpop.f32.mrb[0].mxu0
      %v950 = vadd.f32 0.0, %v949
      %951 = vmatprep.mubr.f32.mxu0 %v860
      %952 = vmatmul.mubr.f32.gmra.mrb[0].mxu0 %v784
      %v953 = vpop.f32.mrb[0].mxu0
      %v954 = vadd.f32 0.0, %v953
      %v955 = vpop.f32.mrb[0].mxu0
      %v956 = vadd.f32 0.0, %v955
      %957 = vdwg.mxu0
      %v958 = vmax.f32 %v936, 0.0
      %v959 = vmax.f32 %v938, 0.0
      %v960 = vmax.f32 %v942, 0.0
      %v961 = vmax.f32 %v944, 0.0
      %v962 = vmax.f32 %v948, 0.0
      %v963 = vmax.f32 %v950, 0.0
      %v964 = vmax.f32 %v954, 0.0
      %v965 = vmax.f32 %v956, 0.0
      %v966 = vsel %vm804, %v959, %v793
      %v967 = vsel %vm804, %v961, %v795
      %v968 = vsel %vm804, %v963, %v797
      %v969 = vsel %vm804, %v965, %v799
      %v972 = vrot.slane %v958, 2
      %v973 = vrot.slane %v966, 2
      %vm982 = vcmask 1041408
      %v983 = vrot.slane %v958, 6
      %v984 = vrot.slane %v966, 6
      %v985 = vrot.slane %v960, 6
      %v986 = vsel %vm982, %v983, %v985
      %v987 = vrot.slane %v967, 6
      %v988 = vsel %vm982, %v984, %v987
      %v989 = vrot.slane %v962, 6
      %v990 = vsel %vm982, %v985, %v989
      %v991 = vrot.slane %v968, 6
      %v992 = vsel %vm982, %v987, %v991
      %v993 = vrot.slane %v964, 6
      %v994 = vsel %vm982, %v989, %v993
      %v995 = vrot.slane %v969, 6
      %v996 = vsel %vm982, %v991, %v995
      %v1002 = vsel %vm862, %v972, %v958
      %v1003 = vsel %vm862, %v973, %v966
      %v1004 = vsel %vm982, %v1002, %v983
      %v1005 = vsel %vm982, %v1003, %v984
      %vm1006 = vcmask 1045504
      %v1007 = vrot.slane %v960, 2
      %v1008 = vsel %vm1006, %v972, %v1007
      %v1009 = vrot.slane %v967, 2
      %v1010 = vsel %vm1006, %v973, %v1009
      %v1011 = vrot.slane %v962, 2
      %v1012 = vsel %vm1006, %v1007, %v1011
      %v1013 = vrot.slane %v968, 2
      %v1014 = vsel %vm1006, %v1009, %v1013
      %v1015 = vrot.slane %v964, 2
      %v1016 = vsel %vm1006, %v1011, %v1015
      %v1017 = vrot.slane %v969, 2
      %v1018 = vsel %vm1006, %v1013, %v1017
      %v1026 = vsel %vm1006, %v1015, %v964
      %v1027 = vsel %vm1006, %v1017, %v969
      %vm1028 = vcmask 1046528
      %v1029 = vsel %vm1028, %v1026, %v993
      %v1030 = vsel %vm1028, %v1027, %v995
      %v1031 = vld [vmem:[%s7] sm:$0xff]
      %v1032 = vld [vmem:[%s7 + $0x8] sm:$0xff]
      %v1033 = vld [vmem:[%s7 + $0x10] sm:$0xff]
      %v1034 = vld [vmem:[%s7 + $0x18] sm:$0xff]
      %v1035 = vld [vmem:[%s7 + $0x20] sm:$0xff]
      %v1036 = vld [vmem:[%s7 + $0x28] sm:$0xff]
      %v1037 = vld [vmem:[%s7 + $0x30] sm:$0xff]
      %v1038 = vld [vmem:[%s7 + $0x38] sm:$0xff]
      %v1039 = vld [vmem:[%s7 + $0x40] sm:$0xff]
      %v1040 = vld [vmem:[%s7 + $0x48] sm:$0xff]
      %v1041 = vld [vmem:[%s7 + $0x50] sm:$0xff]
      %v1042 = vld [vmem:[%s7 + $0x58] sm:$0xff]
      %v1043 = vld [vmem:[%s7 + $0x60] sm:$0xff]
      %v1044 = vld [vmem:[%s7 + $0x68] sm:$0xff]
      %v1045 = vld [vmem:[%s7 + $0x70] sm:$0xff]
      %v1046 = vld [vmem:[%s7 + $0x78] sm:$0xff]
      %v1047 = vld [vmem:[%s7 + $0x80] sm:$0xff]
      %v1048 = vld [vmem:[%s7 + $0x88] sm:$0xff]
      %v1049 = vld [vmem:[%s7 + $0x90] sm:$0xff]
      %v1050 = vld [vmem:[%s7 + $0x98] sm:$0xff]
      %v1051 = vld [vmem:[%s7 + $0xa0] sm:$0xff]
      %v1052 = vld [vmem:[%s7 + $0xa8] sm:$0xff]
      %v1053 = vld [vmem:[%s7 + $0xb0] sm:$0xff]
      %v1054 = vld [vmem:[%s7 + $0xb8] sm:$0xff]
      %v1055 = vld [vmem:[%s7 + $0xc0] sm:$0xff]
      %v1056 = vld [vmem:[%s7 + $0xc8] sm:$0xff]
      %v1057 = vld [vmem:[%s7 + $0xd0] sm:$0xff]
      %v1058 = vld [vmem:[%s7 + $0xd8] sm:$0xff]
      %v1059 = vld [vmem:[%s7 + $0xe0] sm:$0xff]
      %v1060 = vld [vmem:[%s7 + $0xe8] sm:$0xff]
      %v1061 = vld [vmem:[%s7 + $0xf0] sm:$0xff]
      %v1062 = vld [vmem:[%s7 + $0xf8] sm:$0xff]
      %v1063 = vld [vmem:[%s7 + $0x100] sm:$0xff]
      %v1064 = vld [vmem:[%s7 + $0x108] sm:$0xff]
      %v1065 = vld [vmem:[%s7 + $0x110] sm:$0xff]
      %v1066 = vld [vmem:[%s7 + $0x118] sm:$0xff]
      %v1067 = vld [vmem:[%s7 + $0x120] sm:$0xff]
      %v1068 = vld [vmem:[%s7 + $0x128] sm:$0xff]
      %v1069 = vld [vmem:[%s7 + $0x130] sm:$0x1]
      %v1070 = vld [vmem:[%s7 + $0x138] sm:$0x1]
      %s1071 = scalar_lea.vmem %s7, 320
      %v1072 = vld [vmem:[%s1071] sm:$0xff]
      %v1073 = vld [vmem:[%s1071 + $0x8] sm:$0xff]
      %v1074 = vld [vmem:[%s1071 + $0x10] sm:$0xff]
      %v1075 = vld [vmem:[%s1071 + $0x18] sm:$0xff]
      %v1076 = vld [vmem:[%s1071 + $0x20] sm:$0xff]
      %v1077 = vld [vmem:[%s1071 + $0x28] sm:$0xff]
      %v1078 = vld [vmem:[%s1071 + $0x30] sm:$0xff]
      %v1079 = vld [vmem:[%s1071 + $0x38] sm:$0xff]
      %v1080 = vld [vmem:[%s1071 + $0x40] sm:$0xff]
      %v1081 = vld [vmem:[%s1071 + $0x48] sm:$0xff]
      %v1082 = vld [vmem:[%s1071 + $0x50] sm:$0xff]
      %v1083 = vld [vmem:[%s1071 + $0x58] sm:$0xff]
      %v1084 = vld [vmem:[%s1071 + $0x60] sm:$0xff]
      %v1085 = vld [vmem:[%s1071 + $0x68] sm:$0xff]
      %v1086 = vld [vmem:[%s1071 + $0x70] sm:$0xff]
      %v1087 = vld [vmem:[%s1071 + $0x78] sm:$0xff]
      %v1088 = vld [vmem:[%s1071 + $0x80] sm:$0xff]
      %v1089 = vld [vmem:[%s1071 + $0x88] sm:$0xff]
      %v1090 = vld [vmem:[%s1071 + $0x90] sm:$0xff]
      %v1091 = vld [vmem:[%s1071 + $0x98] sm:$0xff]
      %v1092 = vld [vmem:[%s1071 + $0xa0] sm:$0xff]
      %v1093 = vld [vmem:[%s1071 + $0xa8] sm:$0xff]
      %v1094 = vld [vmem:[%s1071 + $0xb0] sm:$0xff]
      %v1095 = vld [vmem:[%s1071 + $0xb8] sm:$0xff]
      %v1096 = vld [vmem:[%s1071 + $0xc0] sm:$0xff]
      %v1097 = vld [vmem:[%s1071 + $0xc8] sm:$0xff]
      %v1098 = vld [vmem:[%s1071 + $0xd0] sm:$0xff]
      %v1099 = vld [vmem:[%s1071 + $0xd8] sm:$0xff]
      %v1100 = vld [vmem:[%s1071 + $0xe0] sm:$0xff]
      %v1101 = vld [vmem:[%s1071 + $0xe8] sm:$0xff]
      %v1102 = vld [vmem:[%s1071 + $0xf0] sm:$0xff]
      %v1103 = vld [vmem:[%s1071 + $0xf8] sm:$0xff]
      %v1104 = vld [vmem:[%s1071 + $0x100] sm:$0xff]
      %v1105 = vld [vmem:[%s1071 + $0x108] sm:$0xff]
      %v1106 = vld [vmem:[%s1071 + $0x110] sm:$0xff]
      %v1107 = vld [vmem:[%s1071 + $0x118] sm:$0xff]
      %v1108 = vld [vmem:[%s1071 + $0x120] sm:$0xff]
      %v1109 = vld [vmem:[%s1071 + $0x128] sm:$0xff]
      %v1110 = vld [vmem:[%s1071 + $0x130] sm:$0x1]
      %v1111 = vld [vmem:[%s1071 + $0x138] sm:$0x1]
      %v1112 = vsel %vm849, %v966, 0
      %v1114 = vsel %vm849, %v967, 0
      %v1116 = vsel %vm849, %v968, 0
      %v1118 = vsel %vm849, %v969, 0
      %v1121 = vsel %vm862, %v1110, 0
      %v1124 = vsel %vm862, %v1111, 0
      %1126 = vmatprep.subr.mxu0 %v1073
      %1127 = vmatpush1.msra.mxu0 %v1072
      %1128 = vmatprep.subr.mxu0 %v1075
      %1129 = vmatpush1.msra.mxu0 %v1074
      %1130 = vmatprep.subr.mxu0 %v1077
      %1131 = vmatpush1.msra.mxu0 %v1076
      %1132 = vmatprep.subr.mxu0 %v1079
      %1133 = vmatpush1.msra.mxu0 %v1078
      %1134 = vmatprep.subr.mxu0 %v1081
      %1135 = vmatpush1.msra.mxu0 %v1080
      %1136 = vmatprep.subr.mxu0 %v1083
      %1137 = vmatpush1.msra.mxu0 %v1082
      %1138 = vmatprep.subr.mxu0 %v1085
      %1139 = vmatpush1.msra.mxu0 %v1084
      %1140 = vmatprep.subr.mxu0 %v1087
      %1141 = vmatpush1.msra.mxu0 %v1086
      %1142 = vmatprep.subr.mxu0 %v1089
      %1143 = vmatpush1.msra.mxu0 %v1088
      %1144 = vmatprep.subr.mxu0 %v1091
      %1145 = vmatpush1.msra.mxu0 %v1090
      %1146 = vmatprep.subr.mxu0 %v1093
      %1147 = vmatpush1.msra.mxu0 %v1092
      %1148 = vmatprep.subr.mxu0 %v1095
      %1149 = vmatpush1.msra.mxu0 %v1094
      %1150 = vmatprep.subr.mxu0 %v1097
      %1151 = vmatpush1.msra.mxu0 %v1096
      %1152 = vmatprep.subr.mxu0 %v1099
      %1153 = vmatpush1.msra.mxu0 %v1098
      %1154 = vmatprep.subr.mxu0 %v1101
      %1155 = vmatpush1.msra.mxu0 %v1100
      %1156 = vmatprep.subr.mxu0 %v1103
      %1157 = vmatpush1.msra.mxu0 %v1102
      %1158 = vmatprep.subr.mxu0 %v1105
      %1159 = vmatpush1.msra.mxu0 %v1104
      %1160 = vmatprep.subr.mxu0 %v1107
      %1161 = vmatpush1.msra.mxu0 %v1106
      %1162 = vmatprep.subr.mxu0 %v1109
      %1163 = vmatpush1.msra.mxu0 %v1108
      %1164 = vmatprep.subr.mxu0 %v1124
      %1165 = vmatpush1.msra.mxu0 %v1121
      %1166 = vmatprep.subr.mxu0 0.0
      %1167 = vmatpush1.msra.mxu0 0.0
      %1168 = vmatprep.subr.mxu0 0.0
      %1169 = vmatpush1.msra.mxu0 0.0
      %1170 = vmatprep.subr.mxu0 0.0
      %1171 = vmatpush1.msra.mxu0 0.0
      %1172 = vmatprep.subr.mxu0 0.0
      %1173 = vmatpush1.msra.mxu0 0.0
      %1174 = vmatprep.subr.mxu0 0.0
      %1175 = vmatpush1.msra.mxu0 0.0
      %1176 = vmatprep.subr.mxu0 0.0
      %1177 = vmatpush1.msra.mxu0 0.0
      %1178 = vmatprep.subr.mxu0 0.0
      %1179 = vmatpush1.msra.mxu0 0.0
      %1180 = vmatprep.subr.mxu0 0.0
      %1181 = vmatpush1.msra.mxu0 0.0
      %1182 = vmatprep.subr.mxu0 0.0
      %1183 = vmatpush1.msra.mxu0 0.0
      %1184 = vmatprep.subr.mxu0 0.0
      %1185 = vmatpush1.msra.mxu0 0.0
      %1186 = vmatprep.subr.mxu0 0.0
      %1187 = vmatpush1.msra.mxu0 0.0
      %1188 = vmatprep.subr.mxu0 0.0
      %1189 = vmatpush1.msra.mxu0 0.0
      %1190 = vmatprep.mubr.f32.mxu0 %v1112
      %1191 = vmatmul.mubr.f32.gmra.mrb[0].mxu0 %v958
      %v1192 = vpop.f32.mrb[0].mxu0
      %v1193 = vadd.f32 0.0, %v1192
      %v1194 = vpop.f32.mrb[0].mxu0
      %v1195 = vadd.f32 0.0, %v1194
      %1196 = vmatprep.mubr.f32.mxu0 %v1114
      %1197 = vmatmul.mubr.f32.gmra.mrb[0].mxu0 %v960
      %v1198 = vpop.f32.mrb[0].mxu0
      %v1199 = vadd.f32 0.0, %v1198
      %v1200 = vpop.f32.mrb[0].mxu0
      %v1201 = vadd.f32 0.0, %v1200
      %1202 = vmatprep.mubr.f32.mxu0 %v1116
      %1203 = vmatmul.mubr.f32.gmra.mrb[0].mxu0 %v962
      %v1204 = vpop.f32.mrb[0].mxu0
      %v1205 = vadd.f32 0.0, %v1204
      %v1206 = vpop.f32.mrb[0].mxu0
      %v1207 = vadd.f32 0.0, %v1206
      %1208 = vmatprep.mubr.f32.mxu0 %v1118
      %1209 = vmatmul.mubr.f32.gmra.mrb[0].mxu0 %v964
      %v1210 = vpop.f32.mrb[0].mxu0
      %v1211 = vadd.f32 0.0, %v1210
      %v1212 = vpop.f32.mrb[0].mxu0
      %v1213 = vadd.f32 0.0, %v1212
      %1214 = vdwg.mxu0
      %v1216 = vsel %vm849, %v1005, 0
      %v1218 = vsel %vm849, %v988, 0
      %v1220 = vsel %vm849, %v992, 0
      %v1222 = vsel %vm849, %v996, 0
      %v1225 = vsel %vm862, %v1069, 0
      %v1228 = vsel %vm862, %v1070, 0
      %1230 = vmatprep.subr.mxu0 %v1032
      %1231 = vmatpush1.msra.mxu0 %v1031
      %1232 = vmatprep.subr.mxu0 %v1034
      %1233 = vmatpush1.msra.mxu0 %v1033
      %1234 = vmatprep.subr.mxu0 %v1036
      %1235 = vmatpush1.msra.mxu0 %v1035
      %1236 = vmatprep.subr.mxu0 %v1038
      %1237 = vmatpush1.msra.mxu0 %v1037
      %1238 = vmatprep.subr.mxu0 %v1040
      %1239 = vmatpush1.msra.mxu0 %v1039
      %1240 = vmatprep.subr.mxu0 %v1042
      %1241 = vmatpush1.msra.mxu0 %v1041
      %1242 = vmatprep.subr.mxu0 %v1044
      %1243 = vmatpush1.msra.mxu0 %v1043
      %1244 = vmatprep.subr.mxu0 %v1046
      %1245 = vmatpush1.msra.mxu0 %v1045
      %1246 = vmatprep.subr.mxu0 %v1048
      %1247 = vmatpush1.msra.mxu0 %v1047
      %1248 = vmatprep.subr.mxu0 %v1050
      %1249 = vmatpush1.msra.mxu0 %v1049
      %1250 = vmatprep.subr.mxu0 %v1052
      %1251 = vmatpush1.msra.mxu0 %v1051
      %1252 = vmatprep.subr.mxu0 %v1054
      %1253 = vmatpush1.msra.mxu0 %v1053
      %1254 = vmatprep.subr.mxu0 %v1056
      %1255 = vmatpush1.msra.mxu0 %v1055
      %1256 = vmatprep.subr.mxu0 %v1058
      %1257 = vmatpush1.msra.mxu0 %v1057
      %1258 = vmatprep.subr.mxu0 %v1060
      %1259 = vmatpush1.msra.mxu0 %v1059
      %1260 = vmatprep.subr.mxu0 %v1062
      %1261 = vmatpush1.msra.mxu0 %v1061
      %1262 = vmatprep.subr.mxu0 %v1064
      %1263 = vmatpush1.msra.mxu0 %v1063
      %1264 = vmatprep.subr.mxu0 %v1066
      %1265 = vmatpush1.msra.mxu0 %v1065
      %1266 = vmatprep.subr.mxu0 %v1068
      %1267 = vmatpush1.msra.mxu0 %v1067
      %1268 = vmatprep.subr.mxu0 %v1228
      %1269 = vmatpush1.msra.mxu0 %v1225
      %1270 = vmatprep.subr.mxu0 0.0
      %1271 = vmatpush1.msra.mxu0 0.0
      %1272 = vmatprep.subr.mxu0 0.0
      %1273 = vmatpush1.msra.mxu0 0.0
      %1274 = vmatprep.subr.mxu0 0.0
      %1275 = vmatpush1.msra.mxu0 0.0
      %1276 = vmatprep.subr.mxu0 0.0
      %1277 = vmatpush1.msra.mxu0 0.0
      %1278 = vmatprep.subr.mxu0 0.0
      %1279 = vmatpush1.msra.mxu0 0.0
      %1280 = vmatprep.subr.mxu0 0.0
      %1281 = vmatpush1.msra.mxu0 0.0
      %1282 = vmatprep.subr.mxu0 0.0
      %1283 = vmatpush1.msra.mxu0 0.0
      %1284 = vmatprep.subr.mxu0 0.0
      %1285 = vmatpush1.msra.mxu0 0.0
      %1286 = vmatprep.subr.mxu0 0.0
      %1287 = vmatpush1.msra.mxu0 0.0
      %1288 = vmatprep.subr.mxu0 0.0
      %1289 = vmatpush1.msra.mxu0 0.0
      %1290 = vmatprep.subr.mxu0 0.0
      %1291 = vmatpush1.msra.mxu0 0.0
      %1292 = vmatprep.subr.mxu0 0.0
      %1293 = vmatpush1.msra.mxu0 0.0
      %1294 = vmatprep.mubr.f32.mxu0 %v1216
      %1295 = vmatmul.mubr.f32.gmra.mrb[0].mxu0 %v1004
      %v1296 = vpop.f32.mrb[0].mxu0
      %v1297 = vadd.f32 %v1193, %v1296
      %v1298 = vpop.f32.mrb[0].mxu0
      %v1299 = vadd.f32 %v1195, %v1298
      %1300 = vmatprep.mubr.f32.mxu0 %v1218
      %1301 = vmatmul.mubr.f32.gmra.mrb[0].mxu0 %v986
      %v1302 = vpop.f32.mrb[0].mxu0
      %v1303 = vadd.f32 %v1199, %v1302
      %v1304 = vpop.f32.mrb[0].mxu0
      %v1305 = vadd.f32 %v1201, %v1304
      %1306 = vmatprep.mubr.f32.mxu0 %v1220
      %1307 = vmatmul.mubr.f32.gmra.mrb[0].mxu0 %v990
      %v1308 = vpop.f32.mrb[0].mxu0
      %v1309 = vadd.f32 %v1205, %v1308
      %v1310 = vpop.f32.mrb[0].mxu0
      %v1311 = vadd.f32 %v1207, %v1310
      %1312 = vmatprep.mubr.f32.mxu0 %v1222
      %1313 = vmatmul.mubr.f32.gmra.mrb[0].mxu0 %v994
      %v1314 = vpop.f32.mrb[0].mxu0
      %v1315 = vadd.f32 %v1211, %v1314
      %v1316 = vpop.f32.mrb[0].mxu0
      %v1317 = vadd.f32 %v1213, %v1316
      %1318 = vdwg.mxu0
      %s1319 = scalar_lea.vmem %s7, 640
      %v1320 = vld [vmem:[%s1319] sm:$0xff]
      %v1321 = vld [vmem:[%s1319 + $0x8] sm:$0xff]
      %v1322 = vld [vmem:[%s1319 + $0x10] sm:$0xff]
      %v1323 = vld [vmem:[%s1319 + $0x18] sm:$0xff]
      %v1324 = vld [vmem:[%s1319 + $0x20] sm:$0xff]
      %v1325 = vld [vmem:[%s1319 + $0x28] sm:$0xff]
      %v1326 = vld [vmem:[%s1319 + $0x30] sm:$0xff]
      %v1327 = vld [vmem:[%s1319 + $0x38] sm:$0xff]
      %v1328 = vld [vmem:[%s1319 + $0x40] sm:$0xff]
      %v1329 = vld [vmem:[%s1319 + $0x48] sm:$0xff]
      %v1330 = vld [vmem:[%s1319 + $0x50] sm:$0xff]
      %v1331 = vld [vmem:[%s1319 + $0x58] sm:$0xff]
      %v1332 = vld [vmem:[%s1319 + $0x60] sm:$0xff]
      %v1333 = vld [vmem:[%s1319 + $0x68] sm:$0xff]
      %v1334 = vld [vmem:[%s1319 + $0x70] sm:$0xff]
      %v1335 = vld [vmem:[%s1319 + $0x78] sm:$0xff]
      %v1336 = vld [vmem:[%s1319 + $0x80] sm:$0xff]
      %v1337 = vld [vmem:[%s1319 + $0x88] sm:$0xff]
      %v1338 = vld [vmem:[%s1319 + $0x90] sm:$0xff]
      %v1339 = vld [vmem:[%s1319 + $0x98] sm:$0xff]
      %v1340 = vld [vmem:[%s1319 + $0xa0] sm:$0xff]
      %v1341 = vld [vmem:[%s1319 + $0xa8] sm:$0xff]
      %v1342 = vld [vmem:[%s1319 + $0xb0] sm:$0xff]
      %v1343 = vld [vmem:[%s1319 + $0xb8] sm:$0xff]
      %v1344 = vld [vmem:[%s1319 + $0xc0] sm:$0xff]
      %v1345 = vld [vmem:[%s1319 + $0xc8] sm:$0xff]
      %v1346 = vld [vmem:[%s1319 + $0xd0] sm:$0xff]
      %v1347 = vld [vmem:[%s1319 + $0xd8] sm:$0xff]
      %v1348 = vld [vmem:[%s1319 + $0xe0] sm:$0xff]
      %v1349 = vld [vmem:[%s1319 + $0xe8] sm:$0xff]
      %v1350 = vld [vmem:[%s1319 + $0xf0] sm:$0xff]
      %v1351 = vld [vmem:[%s1319 + $0xf8] sm:$0xff]
      %v1352 = vld [vmem:[%s1319 + $0x100] sm:$0xff]
      %v1353 = vld [vmem:[%s1319 + $0x108] sm:$0xff]
      %v1354 = vld [vmem:[%s1319 + $0x110] sm:$0xff]
      %v1355 = vld [vmem:[%s1319 + $0x118] sm:$0xff]
      %v1356 = vld [vmem:[%s1319 + $0x120] sm:$0xff]
      %v1357 = vld [vmem:[%s1319 + $0x128] sm:$0xff]
      %v1358 = vld [vmem:[%s1319 + $0x130] sm:$0x1]
      %v1359 = vld [vmem:[%s1319 + $0x138] sm:$0x1]
      %v1360 = vsel %vm849, %v1010, 0
      %v1362 = vsel %vm849, %v1014, 0
      %v1364 = vsel %vm849, %v1018, 0
      %v1367 = vsel %vm849, %v1030, 0
      %v1370 = vsel %vm862, %v1358, 0
      %v1373 = vsel %vm862, %v1359, 0
      %1375 = vmatprep.subr.mxu0 %v1321
      %1376 = vmatpush1.msra.mxu0 %v1320
      %1377 = vmatprep.subr.mxu0 %v1323
      %1378 = vmatpush1.msra.mxu0 %v1322
      %1379 = vmatprep.subr.mxu0 %v1325
      %1380 = vmatpush1.msra.mxu0 %v1324
      %1381 = vmatprep.subr.mxu0 %v1327
      %1382 = vmatpush1.msra.mxu0 %v1326
      %1383 = vmatprep.subr.mxu0 %v1329
      %1384 = vmatpush1.msra.mxu0 %v1328
      %1385 = vmatprep.subr.mxu0 %v1331
      %1386 = vmatpush1.msra.mxu0 %v1330
      %1387 = vmatprep.subr.mxu0 %v1333
      %1388 = vmatpush1.msra.mxu0 %v1332
      %1389 = vmatprep.subr.mxu0 %v1335
      %1390 = vmatpush1.msra.mxu0 %v1334
      %1391 = vmatprep.subr.mxu0 %v1337
      %1392 = vmatpush1.msra.mxu0 %v1336
      %1393 = vmatprep.subr.mxu0 %v1339
      %1394 = vmatpush1.msra.mxu0 %v1338
      %1395 = vmatprep.subr.mxu0 %v1341
      %1396 = vmatpush1.msra.mxu0 %v1340
      %1397 = vmatprep.subr.mxu0 %v1343
      %1398 = vmatpush1.msra.mxu0 %v1342
      %1399 = vmatprep.subr.mxu0 %v1345
      %1400 = vmatpush1.msra.mxu0 %v1344
      %1401 = vmatprep.subr.mxu0 %v1347
      %1402 = vmatpush1.msra.mxu0 %v1346
      %1403 = vmatprep.subr.mxu0 %v1349
      %1404 = vmatpush1.msra.mxu0 %v1348
      %1405 = vmatprep.subr.mxu0 %v1351
      %1406 = vmatpush1.msra.mxu0 %v1350
      %1407 = vmatprep.subr.mxu0 %v1353
      %1408 = vmatpush1.msra.mxu0 %v1352
      %1409 = vmatprep.subr.mxu0 %v1355
      %1410 = vmatpush1.msra.mxu0 %v1354
      %1411 = vmatprep.subr.mxu0 %v1357
      %1412 = vmatpush1.msra.mxu0 %v1356
      %1413 = vmatprep.subr.mxu0 %v1373
      %1414 = vmatpush1.msra.mxu0 %v1370
      %1415 = vmatprep.subr.mxu0 0.0
      %1416 = vmatpush1.msra.mxu0 0.0
      %1417 = vmatprep.subr.mxu0 0.0
      %1418 = vmatpush1.msra.mxu0 0.0
      %1419 = vmatprep.subr.mxu0 0.0
      %1420 = vmatpush1.msra.mxu0 0.0
      %1421 = vmatprep.subr.mxu0 0.0
      %1422 = vmatpush1.msra.mxu0 0.0
      %1423 = vmatprep.subr.mxu0 0.0
      %1424 = vmatpush1.msra.mxu0 0.0
      %1425 = vmatprep.subr.mxu0 0.0
      %1426 = vmatpush1.msra.mxu0 0.0
      %1427 = vmatprep.subr.mxu0 0.0
      %1428 = vmatpush1.msra.mxu0 0.0
      %1429 = vmatprep.subr.mxu0 0.0
      %1430 = vmatpush1.msra.mxu0 0.0
      %1431 = vmatprep.subr.mxu0 0.0
      %1432 = vmatpush1.msra.mxu0 0.0
      %1433 = vmatprep.subr.mxu0 0.0
      %1434 = vmatpush1.msra.mxu0 0.0
      %1435 = vmatprep.subr.mxu0 0.0
      %1436 = vmatpush1.msra.mxu0 0.0
      %1437 = vmatprep.subr.mxu0 0.0
      %1438 = vmatpush1.msra.mxu0 0.0
      %1439 = vmatprep.mubr.f32.mxu0 %v1360
      %1440 = vmatmul.mubr.f32.gmra.mrb[0].mxu0 %v1008
      %v1441 = vpop.f32.mrb[0].mxu0
      %v1442 = vadd.f32 0.0, %v1441
      %v1443 = vpop.f32.mrb[0].mxu0
      %v1444 = vadd.f32 0.0, %v1443
      %1445 = vmatprep.mubr.f32.mxu0 %v1362
      %1446 = vmatmul.mubr.f32.gmra.mrb[0].mxu0 %v1012
      %v1447 = vpop.f32.mrb[0].mxu0
      %v1448 = vadd.f32 0.0, %v1447
      %v1449 = vpop.f32.mrb[0].mxu0
      %v1450 = vadd.f32 0.0, %v1449
      %1451 = vmatprep.mubr.f32.mxu0 %v1364
      %1452 = vmatmul.mubr.f32.gmra.mrb[0].mxu0 %v1016
      %v1453 = vpop.f32.mrb[0].mxu0
      %v1454 = vadd.f32 0.0, %v1453
      %v1455 = vpop.f32.mrb[0].mxu0
      %v1456 = vadd.f32 0.0, %v1455
      %1457 = vmatprep.mubr.f32.mxu0 %v1367
      %1458 = vmatmul.mubr.f32.gmra.mrb[0].mxu0 %v1029
      %v1459 = vpop.f32.mrb[0].mxu0
      %v1460 = vadd.f32 0.0, %v1459
      %v1461 = vpop.f32.mrb[0].mxu0
      %v1462 = vadd.f32 0.0, %v1461
      %1463 = vdwg.mxu0
      %v1464 = vadd.f32 %v1297, %v1442
      %v1465 = vadd.f32 %v1299, %v1444
      %v1466 = vadd.f32 %v1303, %v1448
      %v1467 = vadd.f32 %v1305, %v1450
      %v1468 = vadd.f32 %v1309, %v1454
      %v1469 = vadd.f32 %v1311, %v1456
      %v1470 = vadd.f32 %v1315, %v1460
      %v1471 = vadd.f32 %v1317, %v1462
      %v1472 = vstv %s403
      %v1473 = vmul.f32 %v766, %v1472
      %v1474 = vmul.f32 %v768, %v1472
      %v1475 = vmul.f32 %v772, %v1472
      %v1476 = vmul.f32 %v774, %v1472
      %v1477 = vmul.f32 %v778, %v1472
      %v1478 = vmul.f32 %v780, %v1472
      %v1479 = vmul.f32 %v784, %v1472
      %v1480 = vmul.f32 %v786, %v1472
      %s1481 = ssub.f32 1.0, %s403
      %v1482 = vstv %s1481
      %v1483 = vmul.f32 %v1464, %v1482
      %v1484 = vmul.f32 %v1465, %v1482
      %v1485 = vmul.f32 %v1466, %v1482
      %v1486 = vmul.f32 %v1467, %v1482
      %v1487 = vmul.f32 %v1468, %v1482
      %v1488 = vmul.f32 %v1469, %v1482
      %v1489 = vmul.f32 %v1470, %v1482
      %v1490 = vmul.f32 %v1471, %v1482
      %v1491 = vadd.f32 %v1473, %v1483
      %v1492 = vadd.f32 %v1474, %v1484
      %v1493 = vadd.f32 %v1475, %v1485
      %v1494 = vadd.f32 %v1476, %v1486
      %v1495 = vadd.f32 %v1477, %v1487
      %v1496 = vadd.f32 %v1478, %v1488
      %v1497 = vadd.f32 %v1479, %v1489
      %v1498 = vadd.f32 %v1480, %v1490
      %v1499 = vld [vmem:[%s8] sm:$0xff]
      %v1500 = vld [vmem:[%s8 + $0x8] sm:$0xff]
      %v1501 = vld [vmem:[%s8 + $0x10] sm:$0xff]
      %v1502 = vld [vmem:[%s8 + $0x18] sm:$0xff]
      %v1503 = vld [vmem:[%s8 + $0x20] sm:$0xff]
      %v1504 = vld [vmem:[%s8 + $0x28] sm:$0xff]
      %v1505 = vld [vmem:[%s8 + $0x30] sm:$0xff]
      %v1506 = vld [vmem:[%s8 + $0x38] sm:$0xff]
      %v1508 = vsel %vm416, %v1499, 0
      %v1511 = vsel %vm416, %v1500, 0
      %v1514 = vsel %vm416, %v1501, 0
      %v1517 = vsel %vm416, %v1502, 0
      %v1520 = vsel %vm416, %v1503, 0
      %v1523 = vsel %vm416, %v1504, 0
      %v1526 = vsel %vm416, %v1505, 0
      %v1529 = vsel %vm416, %v1506, 0
      %1531 = vmatprep.subr.mxu0 %v1492
      %1532 = vmatpush1.msra.mxu0 %v1491
      %1533 = vmatprep.subr.mxu0 %v1494
      %1534 = vmatpush1.msra.mxu0 %v1493
      %1535 = vmatprep.subr.mxu0 %v1496
      %1536 = vmatpush1.msra.mxu0 %v1495
      %1537 = vmatprep.subr.mxu0 %v1498
      %1538 = vmatpush1.msra.mxu0 %v1497
      %1539 = vmatprep.subr.mxu0 0.0
      %1540 = vmatpush1.msra.mxu0 0.0
      %1541 = vmatprep.subr.mxu0 0.0
      %1542 = vmatpush1.msra.mxu0 0.0
      %1543 = vmatprep.subr.mxu0 0.0
      %1544 = vmatpush1.msra.mxu0 0.0
      %1545 = vmatprep.subr.mxu0 0.0
      %1546 = vmatpush1.msra.mxu0 0.0
      %1547 = vmatprep.subr.mxu0 0.0
      %1548 = vmatpush1.msra.mxu0 0.0
      %1549 = vmatprep.subr.mxu0 0.0
      %1550 = vmatpush1.msra.mxu0 0.0
      %1551 = vmatprep.subr.mxu0 0.0
      %1552 = vmatpush1.msra.mxu0 0.0
      %1553 = vmatprep.subr.mxu0 0.0
      %1554 = vmatpush1.msra.mxu0 0.0
      %1555 = vmatprep.subr.mxu0 0.0
      %1556 = vmatpush1.msra.mxu0 0.0
      %1557 = vmatprep.subr.mxu0 0.0
      %1558 = vmatpush1.msra.mxu0 0.0
      %1559 = vmatprep.subr.mxu0 0.0
      %1560 = vmatpush1.msra.mxu0 0.0
      %1561 = vmatprep.subr.mxu0 0.0
      %1562 = vmatpush1.msra.mxu0 0.0
      %1563 = vmatprep.subr.mxu0 0.0
      %1564 = vmatpush1.msra.mxu0 0.0
      %1565 = vmatprep.subr.mxu0 0.0
      %1566 = vmatpush1.msra.mxu0 0.0
      %1567 = vmatprep.subr.mxu0 0.0
      %1568 = vmatpush1.msra.mxu0 0.0
      %1569 = vmatprep.subr.mxu0 0.0
      %1570 = vmatpush1.msra.mxu0 0.0
      %1571 = vmatprep.subr.mxu0 0.0
      %1572 = vmatpush1.msra.mxu0 0.0
      %1573 = vmatprep.subr.mxu0 0.0
      %1574 = vmatpush1.msra.mxu0 0.0
      %1575 = vmatprep.subr.mxu0 0.0
      %1576 = vmatpush1.msra.mxu0 0.0
      %1577 = vmatprep.subr.mxu0 0.0
      %1578 = vmatpush1.msra.mxu0 0.0
      %1579 = vmatprep.subr.mxu0 0.0
      %1580 = vmatpush1.msra.mxu0 0.0
      %1581 = vmatprep.subr.mxu0 0.0
      %1582 = vmatpush1.msra.mxu0 0.0
      %1583 = vmatprep.subr.mxu0 0.0
      %1584 = vmatpush1.msra.mxu0 0.0
      %1585 = vmatprep.subr.mxu0 0.0
      %1586 = vmatpush1.msra.mxu0 0.0
      %1587 = vmatprep.subr.mxu0 0.0
      %1588 = vmatpush1.msra.mxu0 0.0
      %1589 = vmatprep.subr.mxu0 0.0
      %1590 = vmatpush1.msra.mxu0 0.0
      %1591 = vmatprep.subr.mxu0 0.0
      %1592 = vmatpush1.msra.mxu0 0.0
      %1593 = vmatprep.subr.mxu0 0.0
      %1594 = vmatpush1.msra.mxu0 0.0
      %1595 = vmatprep.mubr.f32.mxu0 0.0
      %1596 = vmatmul.mubr.f32.gmra.mrb[0].mxu0 %v1508
      %v1597 = vpop.f32.mrb[0].mxu0
      %v1598 = vadd.f32 0.0, %v1597
      %v1599 = vpop.f32.mrb[0].mxu0
      %v1600 = vadd.f32 0.0, %v1599
      %1601 = vmatprep.mubr.f32.mxu0 0.0
      %1602 = vmatmul.mubr.f32.gmra.mrb[0].mxu0 %v1511
      %v1603 = vpop.f32.mrb[0].mxu0
      %v1604 = vadd.f32 0.0, %v1603
      %v1605 = vpop.f32.mrb[0].mxu0
      %v1606 = vadd.f32 0.0, %v1605
      %1607 = vmatprep.mubr.f32.mxu0 0.0
      %1608 = vmatmul.mubr.f32.gmra.mrb[0].mxu0 %v1514
      %v1609 = vpop.f32.mrb[0].mxu0
      %v1610 = vadd.f32 0.0, %v1609
      %v1611 = vpop.f32.mrb[0].mxu0
      %v1612 = vadd.f32 0.0, %v1611
      %1613 = vmatprep.mubr.f32.mxu0 0.0
      %1614 = vmatmul.mubr.f32.gmra.mrb[0].mxu0 %v1517
      %v1615 = vpop.f32.mrb[0].mxu0
      %v1616 = vadd.f32 0.0, %v1615
      %v1617 = vpop.f32.mrb[0].mxu0
      %v1618 = vadd.f32 0.0, %v1617
      %1619 = vmatprep.mubr.f32.mxu0 0.0
      %1620 = vmatmul.mubr.f32.gmra.mrb[0].mxu0 %v1520
      %v1621 = vpop.f32.mrb[0].mxu0
      %v1622 = vadd.f32 0.0, %v1621
      %v1623 = vpop.f32.mrb[0].mxu0
      %v1624 = vadd.f32 0.0, %v1623
      %1625 = vmatprep.mubr.f32.mxu0 0.0
      %1626 = vmatmul.mubr.f32.gmra.mrb[0].mxu0 %v1523
      %v1627 = vpop.f32.mrb[0].mxu0
      %v1628 = vadd.f32 0.0, %v1627
      %v1629 = vpop.f32.mrb[0].mxu0
      %v1630 = vadd.f32 0.0, %v1629
      %1631 = vmatprep.mubr.f32.mxu0 0.0
      %1632 = vmatmul.mubr.f32.gmra.mrb[0].mxu0 %v1526
      %v1633 = vpop.f32.mrb[0].mxu0
      %v1634 = vadd.f32 0.0, %v1633
      %v1635 = vpop.f32.mrb[0].mxu0
      %v1636 = vadd.f32 0.0, %v1635
      %1637 = vmatprep.mubr.f32.mxu0 0.0
      %1638 = vmatmul.mubr.f32.gmra.mrb[0].mxu0 %v1529
      %v1639 = vpop.f32.mrb[0].mxu0
      %v1640 = vadd.f32 0.0, %v1639
      %v1641 = vpop.f32.mrb[0].mxu0
      %v1642 = vadd.f32 0.0, %v1641
      %1643 = vdwg.mxu0
      %v1644 = vld [vmem:[%s9] sm:$0xff]
      %v1645 = vld [vmem:[%s9 + $0x8] sm:$0xff]
      %v1646 = vld [vmem:[%s9 + $0x10] sm:$0xff]
      %v1647 = vld [vmem:[%s9 + $0x18] sm:$0xff]
      %v1648 = vld [vmem:[%s9 + $0x20] sm:$0xff]
      %v1649 = vld [vmem:[%s9 + $0x28] sm:$0xff]
      %v1650 = vld [vmem:[%s9 + $0x30] sm:$0xff]
      %v1651 = vld [vmem:[%s9 + $0x38] sm:$0xff]
      %v1652 = vld [vmem:[%s9 + $0x40] sm:$0xff]
      %v1653 = vld [vmem:[%s9 + $0x48] sm:$0xff]
      %v1654 = vld [vmem:[%s9 + $0x50] sm:$0xff]
      %v1655 = vld [vmem:[%s9 + $0x58] sm:$0xff]
      %v1656 = vld [vmem:[%s9 + $0x60] sm:$0xff]
      %v1657 = vld [vmem:[%s9 + $0x68] sm:$0xff]
      %v1658 = vld [vmem:[%s9 + $0x70] sm:$0xff]
      %v1659 = vld [vmem:[%s9 + $0x78] sm:$0xff]
      %v1660 = vld [vmem:[%s9 + $0x80] sm:$0xff]
      %s1661 = scalar_lea.vmem %s9, 136
      %v1662 = vld [vmem:[%s1661] sm:$0xff]
      %v1663 = vld [vmem:[%s1661 + $0x8] sm:$0xff]
      %v1664 = vld [vmem:[%s1661 + $0x10] sm:$0xff]
      %v1665 = vld [vmem:[%s1661 + $0x18] sm:$0xff]
      %v1666 = vld [vmem:[%s1661 + $0x20] sm:$0xff]
      %v1667 = vld [vmem:[%s1661 + $0x28] sm:$0xff]
      %v1668 = vld [vmem:[%s1661 + $0x30] sm:$0xff]
      %v1669 = vld [vmem:[%s1661 + $0x38] sm:$0xff]
      %v1670 = vld [vmem:[%s1661 + $0x40] sm:$0xff]
      %v1671 = vld [vmem:[%s1661 + $0x48] sm:$0xff]
      %v1672 = vld [vmem:[%s1661 + $0x50] sm:$0xff]
      %v1673 = vld [vmem:[%s1661 + $0x58] sm:$0xff]
      %v1674 = vld [vmem:[%s1661 + $0x60] sm:$0xff]
      %v1675 = vld [vmem:[%s1661 + $0x68] sm:$0xff]
      %v1676 = vld [vmem:[%s1661 + $0x70] sm:$0xff]
      %v1677 = vld [vmem:[%s1661 + $0x78] sm:$0xff]
      %v1678 = vld [vmem:[%s1661 + $0x80] sm:$0xff]
      %v1680 = vsel %vm804, %v1624, 0
      %v1683 = vsel %vm804, %v1630, 0
      %v1686 = vsel %vm804, %v1636, 0
      %v1689 = vsel %vm804, %v1642, 0
      %1691 = vmatprep.subr.mxu0 0.0
      %1692 = vmatpush1.msra.mxu0 %v1662
      %1693 = vmatprep.subr.mxu0 0.0
      %1694 = vmatpush1.msra.mxu0 %v1663
      %1695 = vmatprep.subr.mxu0 0.0
      %1696 = vmatpush1.msra.mxu0 %v1664
      %1697 = vmatprep.subr.mxu0 0.0
      %1698 = vmatpush1.msra.mxu0 %v1665
      %1699 = vmatprep.subr.mxu0 0.0
      %1700 = vmatpush1.msra.mxu0 %v1666
      %1701 = vmatprep.subr.mxu0 0.0
      %1702 = vmatpush1.msra.mxu0 %v1667
      %1703 = vmatprep.subr.mxu0 0.0
      %1704 = vmatpush1.msra.mxu0 %v1668
      %1705 = vmatprep.subr.mxu0 0.0
      %1706 = vmatpush1.msra.mxu0 %v1669
      %1707 = vmatprep.subr.mxu0 0.0
      %1708 = vmatpush1.msra.mxu0 %v1670
      %1709 = vmatprep.subr.mxu0 0.0
      %1710 = vmatpush1.msra.mxu0 %v1671
      %1711 = vmatprep.subr.mxu0 0.0
      %1712 = vmatpush1.msra.mxu0 %v1672
      %1713 = vmatprep.subr.mxu0 0.0
      %1714 = vmatpush1.msra.mxu0 %v1673
      %1715 = vmatprep.subr.mxu0 0.0
      %1716 = vmatpush1.msra.mxu0 %v1674
      %1717 = vmatprep.subr.mxu0 0.0
      %1718 = vmatpush1.msra.mxu0 %v1675
      %1719 = vmatprep.subr.mxu0 0.0
      %1720 = vmatpush1.msra.mxu0 %v1676
      %1721 = vmatprep.subr.mxu0 0.0
      %1722 = vmatpush1.msra.mxu0 %v1677
      %1723 = vmatprep.subr.mxu0 0.0
      %1724 = vmatpush1.msra.mxu0 %v1678
      %1725 = vmatprep.subr.mxu0 0.0
      %1726 = vmatpush1.msra.mxu0 0.0
      %1727 = vmatprep.subr.mxu0 0.0
      %1728 = vmatpush1.msra.mxu0 0.0
      %1729 = vmatprep.subr.mxu0 0.0
      %1730 = vmatpush1.msra.mxu0 0.0
      %1731 = vmatprep.subr.mxu0 0.0
      %1732 = vmatpush1.msra.mxu0 0.0
      %1733 = vmatprep.subr.mxu0 0.0
      %1734 = vmatpush1.msra.mxu0 0.0
      %1735 = vmatprep.subr.mxu0 0.0
      %1736 = vmatpush1.msra.mxu0 0.0
      %1737 = vmatprep.subr.mxu0 0.0
      %1738 = vmatpush1.msra.mxu0 0.0
      %1739 = vmatprep.subr.mxu0 0.0
      %1740 = vmatpush1.msra.mxu0 0.0
      %1741 = vmatprep.subr.mxu0 0.0
      %1742 = vmatpush1.msra.mxu0 0.0
      %1743 = vmatprep.subr.mxu0 0.0
      %1744 = vmatpush1.msra.mxu0 0.0
      %1745 = vmatprep.subr.mxu0 0.0
      %1746 = vmatpush1.msra.mxu0 0.0
      %1747 = vmatprep.subr.mxu0 0.0
      %1748 = vmatpush1.msra.mxu0 0.0
      %1749 = vmatprep.subr.mxu0 0.0
      %1750 = vmatpush1.msra.mxu0 0.0
      %1751 = vmatprep.subr.mxu0 0.0
      %1752 = vmatpush1.msra.mxu0 0.0
      %1753 = vmatprep.subr.mxu0 0.0
      %1754 = vmatpush1.msra.mxu0 0.0
      %1755 = vmatprep.mubr.f32.mxu0 %v1680
      %1756 = vmatmul.mubr.f32.gmra.mrb[0].mxu0 %v1622
      %v1757 = vpop.f32.mrb[0].mxu0
      %v1758 = vadd.f32 0.0, %v1757
      %v1759 = vpop.f32.mrb[0].mxu0
      %1760 = vmatprep.mubr.f32.mxu0 %v1683
      %1761 = vmatmul.mubr.f32.gmra.mrb[0].mxu0 %v1628
      %v1762 = vpop.f32.mrb[0].mxu0
      %v1763 = vadd.f32 0.0, %v1762
      %v1764 = vpop.f32.mrb[0].mxu0
      %1765 = vmatprep.mubr.f32.mxu0 %v1686
      %1766 = vmatmul.mubr.f32.gmra.mrb[0].mxu0 %v1634
      %v1767 = vpop.f32.mrb[0].mxu0
      %v1768 = vadd.f32 0.0, %v1767
      %v1769 = vpop.f32.mrb[0].mxu0
      %1770 = vmatprep.mubr.f32.mxu0 %v1689
      %1771 = vmatmul.mubr.f32.gmra.mrb[0].mxu0 %v1640
      %v1772 = vpop.f32.mrb[0].mxu0
      %v1773 = vadd.f32 0.0, %v1772
      %v1774 = vpop.f32.mrb[0].mxu0
      %1775 = vdwg.mxu0
      %v1777 = vsel %vm804, %v1600, 0
      %v1780 = vsel %vm804, %v1606, 0
      %v1783 = vsel %vm804, %v1612, 0
      %v1786 = vsel %vm804, %v1618, 0
      %1788 = vmatprep.subr.mxu0 0.0
      %1789 = vmatpush1.msra.mxu0 %v1644
      %1790 = vmatprep.subr.mxu0 0.0
      %1791 = vmatpush1.msra.mxu0 %v1645
      %1792 = vmatprep.subr.mxu0 0.0
      %1793 = vmatpush1.msra.mxu0 %v1646
      %1794 = vmatprep.subr.mxu0 0.0
      %1795 = vmatpush1.msra.mxu0 %v1647
      %1796 = vmatprep.subr.mxu0 0.0
      %1797 = vmatpush1.msra.mxu0 %v1648
      %1798 = vmatprep.subr.mxu0 0.0
      %1799 = vmatpush1.msra.mxu0 %v1649
      %1800 = vmatprep.subr.mxu0 0.0
      %1801 = vmatpush1.msra.mxu0 %v1650
      %1802 = vmatprep.subr.mxu0 0.0
      %1803 = vmatpush1.msra.mxu0 %v1651
      %1804 = vmatprep.subr.mxu0 0.0
      %1805 = vmatpush1.msra.mxu0 %v1652
      %1806 = vmatprep.subr.mxu0 0.0
      %1807 = vmatpush1.msra.mxu0 %v1653
      %1808 = vmatprep.subr.mxu0 0.0
      %1809 = vmatpush1.msra.mxu0 %v1654
      %1810 = vmatprep.subr.mxu0 0.0
      %1811 = vmatpush1.msra.mxu0 %v1655
      %1812 = vmatprep.subr.mxu0 0.0
      %1813 = vmatpush1.msra.mxu0 %v1656
      %1814 = vmatprep.subr.mxu0 0.0
      %1815 = vmatpush1.msra.mxu0 %v1657
      %1816 = vmatprep.subr.mxu0 0.0
      %1817 = vmatpush1.msra.mxu0 %v1658
      %1818 = vmatprep.subr.mxu0 0.0
      %1819 = vmatpush1.msra.mxu0 %v1659
      %1820 = vmatprep.subr.mxu0 0.0
      %1821 = vmatpush1.msra.mxu0 %v1660
      %1822 = vmatprep.subr.mxu0 0.0
      %1823 = vmatpush1.msra.mxu0 0.0
      %1824 = vmatprep.subr.mxu0 0.0
      %1825 = vmatpush1.msra.mxu0 0.0
      %1826 = vmatprep.subr.mxu0 0.0
      %1827 = vmatpush1.msra.mxu0 0.0
      %1828 = vmatprep.subr.mxu0 0.0
      %1829 = vmatpush1.msra.mxu0 0.0
      %1830 = vmatprep.subr.mxu0 0.0
      %1831 = vmatpush1.msra.mxu0 0.0
      %1832 = vmatprep.subr.mxu0 0.0
      %1833 = vmatpush1.msra.mxu0 0.0
      %1834 = vmatprep.subr.mxu0 0.0
      %1835 = vmatpush1.msra.mxu0 0.0
      %1836 = vmatprep.subr.mxu0 0.0
      %1837 = vmatpush1.msra.mxu0 0.0
      %1838 = vmatprep.subr.mxu0 0.0
      %1839 = vmatpush1.msra.mxu0 0.0
      %1840 = vmatprep.subr.mxu0 0.0
      %1841 = vmatpush1.msra.mxu0 0.0
      %1842 = vmatprep.subr.mxu0 0.0
      %1843 = vmatpush1.msra.mxu0 0.0
      %1844 = vmatprep.subr.mxu0 0.0
      %1845 = vmatpush1.msra.mxu0 0.0
      %1846 = vmatprep.subr.mxu0 0.0
      %1847 = vmatpush1.msra.mxu0 0.0
      %1848 = vmatprep.subr.mxu0 0.0
      %1849 = vmatpush1.msra.mxu0 0.0
      %1850 = vmatprep.subr.mxu0 0.0
      %1851 = vmatpush1.msra.mxu0 0.0
      %1852 = vmatprep.mubr.f32.mxu0 %v1777
      %1853 = vmatmul.mubr.f32.gmra.mrb[0].mxu0 %v1598
      %v1854 = vpop.f32.mrb[0].mxu0
      %v1855 = vadd.f32 %v1758, %v1854
      %v1856 = vpop.f32.mrb[0].mxu0
      %1857 = vmatprep.mubr.f32.mxu0 %v1780
      %1858 = vmatmul.mubr.f32.gmra.mrb[0].mxu0 %v1604
      %v1859 = vpop.f32.mrb[0].mxu0
      %v1860 = vadd.f32 %v1763, %v1859
      %v1861 = vpop.f32.mrb[0].mxu0
      %1862 = vmatprep.mubr.f32.mxu0 %v1783
      %1863 = vmatmul.mubr.f32.gmra.mrb[0].mxu0 %v1610
      %v1864 = vpop.f32.mrb[0].mxu0
      %v1865 = vadd.f32 %v1768, %v1864
      %v1866 = vpop.f32.mrb[0].mxu0
      %1867 = vmatprep.mubr.f32.mxu0 %v1786
      %1868 = vmatmul.mubr.f32.gmra.mrb[0].mxu0 %v1616
      %v1869 = vpop.f32.mrb[0].mxu0
      %v1870 = vadd.f32 %v1773, %v1869
      %v1871 = vpop.f32.mrb[0].mxu0
      %1872 = vdwg.mxu0
      %1873 = vst [vmem:[%s394] sm:$0xff] %v1855
      %1874 = vst [vmem:[%s394 + $0x8] sm:$0xff] %v1860
      %1875 = vst [vmem:[%s394 + $0x10] sm:$0xff] %v1865
      %1876 = vst [vmem:[%s394 + $0x18] sm:$0xff] %v1870
      %v1877 = vadd.f32 %v1855, %v1860
      %v1878 = vadd.f32 %v1877, %v1865
      %v1879 = vadd.f32 %v1878, %v1870
      %v1880 = vrot.slane %v1879, 4
      %v1881 = vadd.f32 %v1879, %v1880
      %v1882 = vrot.slane %v1881, 2
      %v1883 = vadd.f32 %v1881, %v1882
      %v1884 = vrot.slane %v1883, 1
      %v1885 = vadd.f32 %v1883, %v1884
      %v1886 = vadd.f32 %v399, %v400
      %v1887 = vadd.f32 %v1886, %v401
      %v1888 = vadd.f32 %v1887, %v402
      %v1889 = vrot.slane %v1888, 4
      %v1890 = vadd.f32 %v1888, %v1889
      %v1891 = vrot.slane %v1890, 2
      %v1892 = vadd.f32 %v1890, %v1891
      %v1893 = vrot.slane %v1892, 1
      %v1894 = vadd.f32 %v1892, %v1893
      %v1895 = vmin.f32 %v399, %v400
      %v1896 = vmin.f32 %v401, %v402
      %v1897 = vmin.f32 %v1895, %v1896
      %v1898 = vrot.slane %v1897, 4
      %v1899 = vmin.f32 %v1897, %v1898
      %v1900 = vrot.slane %v1899, 2
      %v1901 = vmin.f32 %v1899, %v1900
      %v1902 = vrot.slane %v1901, 1
      %v1903 = vmin.f32 %v1901, %v1902
      %v1904 = vmax.f32 %v399, %v400
      %v1905 = vmax.f32 %v401, %v402
      %v1906 = vmax.f32 %v1904, %v1905
      %v1907 = vrot.slane %v1906, 4
      %v1908 = vmax.f32 %v1906, %v1907
      %v1909 = vrot.slane %v1908, 2
      %v1910 = vmax.f32 %v1908, %v1909
      %v1911 = vrot.slane %v1910, 1
      %v1912 = vmax.f32 %v1910, %v1911
      %v1913 = vsel %vm862, %v1885, %v1894
      %v1914 = vsel %vm982, %v1913, %v1903
      %vm1915 = vcmask 1042432
      %v1916 = vsel %vm1915, %v1914, %v1912
      %1917 = vst [vmem:[%s398] sm:$0xf] %v1916
      %p1918 = scmp.lt.s32.totalorder %s24, 1
      %s1919 = scalar_select %p1918, %s24, 1
      %s1920 = smul.addr %s1919, 4
      %s1921 = smul.addr %s1920, 8
      %s1922 = scalar_lea.vmem %s10, %s1921
      %p1923 = scmp.lt.s32.totalorder %s24, 1
      %s1924 = scalar_select %p1923, %s24, 1
      %s1925 = smul.addr %s1924, 4
      %s1926 = scalar_lea.vmem %s11, %s1925
      // Predicated region
      $region61: #{fourier_unit_modified.2} parent=59 // pred_check
        %p1927 = pneg %p257
      $region62: #{fourier_unit_modified.2} parent=59 // pred_check_branch
        %1929 = sbr.rel (%p1927) target = $region64
      $region63: #{fourier_unit_modified.2} parent=59 // pred_region
        _
      $region64: #{fourier_unit_modified.2} parent=59 // pred_fallthru
        _
      // Predicated region
      $region65: #{fourier_unit_modified.2} parent=59 // pred_check
        %p1930 = pneg %p283
      $region66: #{fourier_unit_modified.2} parent=59 // pred_check_branch
        %1932 = sbr.rel (%p1930) target = $region68
      $region67: #{fourier_unit_modified.2} parent=59 // pred_region
        _
      $region68: #{fourier_unit_modified.2} parent=59 // pred_fallthru
        _
    $region60: #{fourier_unit_modified.2} parent=5 // pred_fallthru
      _
    %p1933 = scmp.le.s32.totalorder 2, %s19
    // Predicated region
    $region69: #{fourier_unit_modified.2} parent=5 // pred_check
      %p1934 = pneg %p1933
    $region70: #{fourier_unit_modified.2} parent=5 // pred_check_branch
      %1936 = sbr.rel (%p1934) target = $region72
    $region71: #{fourier_unit_modified.2} parent=5 // pred_region
      %s1937 = ssub.s32 %s19, 2
      // Predicated region
      $region73: #{fourier_unit_modified.2} parent=71 // pred_check
        %p1938 = pneg %p263
      $region74: #{fourier_unit_modified.2} parent=71 // pred_check_branch
        %1940 = sbr.rel (%p1938) target = $region76
      $region75: #{fourier_unit_modified.2} parent=71 // pred_region
        %p1941 = scmp.lt.s32.totalorder %s25, 1
        %s1942 = scalar_select %p1941, %s25, 1
        %s1943 = smul.addr %s1942, 4
        %s1944 = smul.addr %s1943, 8
        %s1945 = scalar_lea.vmem %s10, %s1944
      $region76: #{fourier_unit_modified.2} parent=71 // pred_fallthru
        _
      // Predicated region
      $region77: #{fourier_unit_modified.2} parent=71 // pred_check
        %p1946 = pneg %p289
      $region78: #{fourier_unit_modified.2} parent=71 // pred_check_branch
        %1948 = sbr.rel (%p1946) target = $region80
      $region79: #{fourier_unit_modified.2} parent=71 // pred_region
        %p1949 = scmp.lt.s32.totalorder %s25, 1
        %s1950 = scalar_select %p1949, %s25, 1
        %s1951 = smul.addr %s1950, 4
        %s1952 = scalar_lea.vmem %s11, %s1951
      $region80: #{fourier_unit_modified.2} parent=71 // pred_fallthru
        _
    $region72: #{fourier_unit_modified.2} parent=5 // pred_fallthru
      _
  $region6: #{fourier_unit_modified.2} parent=0 // loop_footer
    %s23 = sadd.s32 1, %s19
  $region7: #{fourier_unit_modified.2} parent=0 // loop_footer_branch
    %18 = sbr.rel target = $region3
  $region8: #{fourier_unit_modified.2} parent=0 // loop_exit
    _

</llo_original>
